<compile_context>
chip_gen: v7x
topology: tpu7x:2x2x1
jax: 0.10.0
libtpu: 0.0.40
codegen_flags: <defaults>
</compile_context>

<pallas_src>
import functools
import math

import jax
import jax.numpy as jnp
from jax import lax
from jax.experimental import pallas as pl
from jax.experimental.pallas import tpu as pltpu
from jax.scipy.special import gammaln, digamma

_HALF_LOG_2PI = 0.9189385332046727


def _round_up(x, m):
    return ((x + m - 1) // m) * m


_VMEM_CAP_CACHE = [None]


def _vmem_capacity_bytes():
    """Physical VMEM per core; conservative (v7x-safe) fallback if unknown."""
    if _VMEM_CAP_CACHE[0] is None:
        try:
            _VMEM_CAP_CACHE[0] = int(pltpu.get_tpu_info().vmem_capacity_bytes)
        except Exception:
            _VMEM_CAP_CACHE[0] = 64 * 1024 * 1024
    return _VMEM_CAP_CACHE[0]


# ---------------------------------------------------------------------------
# In-kernel special functions (Mosaic has no lgamma/digamma lowering), valid
# for x > 0: shift-by-8 recurrence + Stirling series, float32-accurate.
# Used only in the once-per-batch-block finalize path.
# ---------------------------------------------------------------------------
def _lgamma(x):
    z = x
    prod = jnp.ones_like(x)
    for _ in range(8):               # running product -> single log at the end
        small = z < 8.0
        prod = prod * jnp.where(small, z, 1.0)
        z = jnp.where(small, z + 1.0, z)
    inv = pl.reciprocal(z, approx=True)      # EUP, nearly free; series is <=1e-2
    inv2 = inv * inv
    series = inv * (1.0 / 12.0
                    + inv2 * (-1.0 / 360.0
                              + inv2 * (1.0 / 1260.0
                                        + inv2 * (-1.0 / 1680.0))))
    return (z - 0.5) * jnp.log(z) - z + _HALF_LOG_2PI + series - jnp.log(prod)


def _digamma(x):
    z = x
    shift = jnp.zeros_like(x)
    for _ in range(8):
        small = z < 8.0
        shift = shift + jnp.where(small, 1.0 / z, 0.0)   # exact div (O(1) terms)
        z = jnp.where(small, z + 1.0, z)
    inv = pl.reciprocal(z, approx=True)
    inv2 = inv * inv
    series = inv2 * (-1.0 / 12.0 + inv2 * (1.0 / 120.0 + inv2 * (-1.0 / 252.0)))
    return jnp.log(z) - 0.5 * inv + series - shift


# ---------------------------------------------------------------------------
# Fused kernel: Poisson negative log-likelihood + Dirichlet KL.
#   grid = (B_pad/bB [parallel], S_pad/sS [arbitrary])
#   rate_ref (bB,sS,P) | cm_ref / mask_ref / qp_ref (bB,P) | lgc_ref (bB,1)
#   negll_ref (bB,1) accumulated over the S axis | klp_ref (bB,1) last step only
# ---------------------------------------------------------------------------
def _loss_kernel(eps, inv_s, c_prior, lg_sum_p, sum_lg_ap, chunk, n_chunks,
                 unroll, rate_ref, cm_ref, mask_ref, lgc_ref, qp_ref,
                 negll_ref, klp_ref):
    s_idx = pl.program_id(1)

    @pl.when(s_idx == 0)
    def _init():
        negll_ref[...] = jnp.zeros_like(negll_ref)

    cm = cm_ref[...]        # counts * mask   (bB, P)
    mask = mask_ref[...]    # dead-pixel mask (bB, P)

    # Consume the (bB, sS, P) block in sublane-aligned sub-chunks so only
    # (bB, chunk, P) temporaries are live regardless of how big sS grows.
    def body(j, carry):
        sum_log, sum_rate = carry
        start = pl.multiple_of(j * chunk, chunk)
        r = rate_ref[:, pl.ds(start, chunk), :].astype(jnp.float32) + eps
        return (sum_log + jnp.sum(jnp.log(r), axis=1),
                sum_rate + jnp.sum(r, axis=1))

    zero = jnp.zeros(cm.shape, jnp.float32)
    sum_log, sum_rate = lax.fori_loop(0, n_chunks, body, (zero, zero),
                                      unroll=unroll)

    partial = cm * sum_log - mask * sum_rate                     # (bB, P)
    negll_ref[...] += jnp.sum(partial, axis=-1, keepdims=True)   # (bB, 1)

    @pl.when(s_idx == pl.num_programs(1) - 1)
    def _finalize():
        # neg_ll = sum_P mask*lgamma(counts+1) - (accum)/S   (lgc precomputed)
        negll_ref[...] = lgc_ref[...] - negll_ref[...] * inv_s

        # KL( Dirichlet(aq) || Dirichlet(c * ones(P)) ), prior terms hoisted.
        aq = qp_ref[...]                                           # (bB, P)
        sum_q = jnp.sum(aq, axis=-1, keepdims=True)                # (bB, 1)
        dg_sum_q = _digamma(sum_q)
        t2 = jnp.sum(_lgamma(aq), axis=-1, keepdims=True) - sum_lg_ap
        t34 = jnp.sum((aq - c_prior) * (_digamma(aq) - dg_sum_q),
                      axis=-1, keepdims=True)
        klp_ref[...] = _lgamma(sum_q) - lg_sum_p - t2 + t34


# Closed-form KL(Gamma(a_q,b_q) || Gamma(a_p,b_p)) -- (B,) sized, plain JAX.
def _gamma_kl(a_q, b_q, a_p, b_p):
    return (a_p * (jnp.log(b_q) - math.log(b_p)) + math.lgamma(a_p) - gammaln(a_q)
            + (a_q - a_p) * digamma(a_q) + (b_p - b_q) * a_q / b_q)


def _select_blocks(B, S, P, rate_itemsize, target_blk_bytes):
    """Block sizes sized by VMEM bytes; honour the (8,128)/full-extent rule."""
    p_pad = _round_up(P, 128)                     # lane padding in VMEM

    # Batch block: multiple of 8 or full extent (constraint from the 2-D
    # inputs / (bB,1) outputs).  Prefer >=2 parallel blocks (v7x dual-TC).
    if B <= 8:
        bB = B
    elif B % 8 == 0:
        bB = 16 if (B % 16 == 0 and B >= 32) else 8
    elif B <= 64:
        bB = B            # full-extent leading block: no padded HBM traffic
    else:
        bB = 8            # pad batch up to a multiple of 8 (small waste)
    B_pad = _round_up(B, bB)

    # Sample block: multiple of 8 (sublane quantum), sized by bytes so the
    # double-buffered rate block fits the per-generation budget.
    max_bs = max(8, target_blk_bytes // (p_pad * rate_itemsize))  # bB*sS cap
    sS_cap = max(8, (max_bs // max(bB, 1)) // 8 * 8)
    if S <= sS_cap:
        sS = _round_up(S, 8)
    else:
        sS = 0
        for cand in range(sS_cap, 7, -8):         # largest 8-multiple dividing S
            if S % cand == 0:
                sS = cand
                break
        if sS == 0:                               # balance blocks, minimal pad
            n_blk = -(-S // sS_cap)
            sS = _round_up(-(-S // n_blk), 8)
    S_pad = _round_up(S, sS)

    # Inner chunk bounds in-kernel f32 temporaries to (bB, chunk, P).
    chunk = 8
    for cand in (32, 16):
        if sS % cand == 0:
            chunk = cand
            break
    return bB, B_pad, sS, S_pad, chunk


class PallasLoss:
    """JAX/Pallas port of the torch `Loss` module (default config)."""

    def __init__(self, beta=1.0, eps=1e-5,
                 p_prf_params=None, p_prf_scale=1e-4,
                 p_bg_params=None, p_bg_scale=1e-4,
                 p_I_params=None, p_I_scale=1e-4,
                 prior_shape=(3, 21, 21)):
        p_prf_params = p_prf_params or {'concentration': 1.0}
        p_bg_params = p_bg_params or {'concentration': 1.0, 'rate': 1.0}
        p_I_params = p_I_params or {'concentration': 1.0, 'rate': 1.0}

        self.eps = float(eps)
        self.beta = float(beta)                  # unused in forward (as in torch)
        self.p_prf_scale = float(p_prf_scale)
        self.p_bg_scale = float(p_bg_scale)
        self.p_I_scale = float(p_I_scale)
        self.prior_shape = prior_shape
        self.profile_size = prior_shape[0] * prior_shape[1] * prior_shape[2]

        # Dirichlet prior = c * ones(P): every prior-only quantity is a scalar.
        c = float(p_prf_params['concentration'])
        P = self.profile_size
        self._c_prf = c
        self._lg_sum_p = math.lgamma(P * c)          # lgamma(sum alpha_p)
        self._sum_lg_ap = P * math.lgamma(c)         # sum_j lgamma(alpha_p_j)
        # kept only for the pure-JAX reference check (mirrors the torch buffer)
        self.concentration = jnp.ones((1, P), jnp.float32) * c

        self._gamma_prior = (float(p_I_params['concentration']),
                             float(p_I_params['rate']),
                             float(p_bg_params['concentration']),
                             float(p_bg_params['rate']))

        # TODO(synk): inverse-Simpson / TV-3D / entropy regularizers and the
        # center-focused / file-loaded Dirichlet prior are not implemented
        # (defaults in the torch module disable them, so those terms are 0).

    def forward(self, rate, counts, q_p_concentration,
                q_i_concentration, q_i_rate,
                q_bg_concentration, q_bg_rate,
                dead_pixel_mask):
        B, S, P = rate.shape
        f32 = jnp.float32
        # Stream `rate` at its native dtype (f32 or bf16); bf16 halves the only
        # large HBM stream.  Math is upcast to f32 inside the kernel.
        if rate.dtype not in (jnp.float32, jnp.bfloat16):
            rate = rate.astype(f32)
        counts = counts.astype(f32)
        mask2d = dead_pixel_mask.reshape(B, P).astype(f32)
        qp = q_p_concentration.astype(f32)

        # Hoisted (B,P)-once quantities (removed from the per-S streaming path).
        cm = counts * mask2d                                                 # (B,P)
        lgc = jnp.sum(gammaln(counts + 1.0) * mask2d, axis=-1, keepdims=True)  # (B,1)

        # VMEM budget per generation (v7x = 64 MiB/TC; v5e/v6e = 128 MiB).
        vmem_cap = _vmem_capacity_bytes()
        vmem_limit = max(32 << 20, min(int(vmem_cap * 0.85), 100 << 20))
        target_blk = vmem_limit // 5        # per rate buffer (double-buffered)
        itemsize = jnp.dtype(rate.dtype).itemsize
        bB, B_pad, sS, S_pad, chunk = _select_blocks(B, S, P, itemsize, target_blk)
        n_chunks = sS // chunk
        unroll = n_chunks <= 16
        grid = (B_pad // bB, S_pad // sS)

        # Exact analytic correction for padded samples (rate==0 -> r==eps).
        s_extra = None
        if S_pad != S:
            s_extra = (S_pad - S) * jnp.sum(
                cm * math.log(self.eps) - mask2d * self.eps, axis=-1) / S    # (B,)

        rate_k, cm_k, mask_k, qp_k, lgc_k = rate, cm, mask2d, qp, lgc
        if S_pad != S:
            rate_k = jnp.pad(rate_k, ((0, 0), (0, S_pad - S), (0, 0)))
        if B_pad != B:
            rate_k = jnp.pad(rate_k, ((0, B_pad - B), (0, 0), (0, 0)))
            cm_k = jnp.pad(cm_k, ((0, B_pad - B), (0, 0)))
            mask_k = jnp.pad(mask_k, ((0, B_pad - B), (0, 0)))
            qp_k = jnp.pad(qp_k, ((0, B_pad - B), (0, 0)), constant_values=1.0)
            lgc_k = jnp.pad(lgc_k, ((0, B_pad - B), (0, 0)))

        kernel = functools.partial(
            _loss_kernel, self.eps, 1.0 / S, self._c_prf,
            self._lg_sum_p, self._sum_lg_ap, chunk, n_chunks, unroll)

        cost = pl.CostEstimate(
            flops=int(5 * B_pad * S_pad * P + 100 * B_pad * P),
            transcendentals=int(B_pad * S_pad * P + 20 * B_pad * P),
            bytes_accessed=int(itemsize * B_pad * S_pad * P
                               + 4 * (4 * B_pad * P + 3 * B_pad)),
        )

        neg_ll, kl_p = pl.pallas_call(
            kernel,
            grid=grid,
            in_specs=[
                pl.BlockSpec((bB, sS, P), lambda i, s: (i, s, 0)),   # rate stream
                pl.BlockSpec((bB, P), lambda i, s: (i, 0)),          # counts*mask
                pl.BlockSpec((bB, P), lambda i, s: (i, 0)),          # mask
                pl.BlockSpec((bB, 1), lambda i, s: (i, 0)),          # sum lgamma(c+1)*mask
                pl.BlockSpec((bB, P), lambda i, s: (i, 0)),          # q_p concentration
            ],
            out_specs=(
                pl.BlockSpec((bB, 1), lambda i, s: (i, 0)),          # neg_ll
                pl.BlockSpec((bB, 1), lambda i, s: (i, 0)),          # kl_p
            ),
            out_shape=(
                jax.ShapeDtypeStruct((B_pad, 1), f32),
                jax.ShapeDtypeStruct((B_pad, 1), f32),
            ),
            compiler_params=pltpu.CompilerParams(
                dimension_semantics=("parallel", "arbitrary"),
                vmem_limit_bytes=vmem_limit,
            ),
            cost_estimate=cost,
        )(rate_k, cm_k, mask_k, lgc_k, qp_k)

        neg_ll = neg_ll[:B, 0]
        kl_p = kl_p[:B, 0]
        if s_extra is not None:
            neg_ll = neg_ll + s_extra

        # (B,)-sized closed-form Gamma KLs: trivial scalar math, plain JAX.
        a_i, b_i, a_bg, b_bg = self._gamma_prior
        kl_i = _gamma_kl(q_i_concentration.astype(f32), q_i_rate.astype(f32), a_i, b_i)
        kl_bg = _gamma_kl(q_bg_concentration.astype(f32), q_bg_rate.astype(f32), a_bg, b_bg)

        kl_terms = (kl_p * self.p_prf_scale
                    + kl_bg * self.p_bg_scale
                    + kl_i * self.p_I_scale)

        zeros = jnp.zeros((B,), f32)   # simpson / tv / entropy terms (scales=None)
        batch_loss = neg_ll + kl_terms + zeros + zeros + zeros
        total_loss = batch_loss.mean()

        return (total_loss, neg_ll.mean(), kl_terms.mean(), kl_bg.mean(),
                kl_i.mean(), kl_p.mean(), zeros.mean(), zeros.mean(), zeros.mean())


# ---------------------------------------------------------------------------
# Pure-JAX reference (numeric sanity check only).
# ---------------------------------------------------------------------------
def _ref_forward(rate, counts, qp_conc, qi_c, qi_r, qbg_c, qbg_r, mask, conc_p,
                 eps=1e-5, s_prf=1e-4, s_bg=1e-4, s_i=1e-4):
    r = rate.astype(jnp.float32) + eps
    ll = counts[:, None, :] * jnp.log(r) - r - gammaln(counts + 1.0)[:, None, :]
    ll_mean = jnp.mean(ll, axis=1) * mask.reshape(mask.shape[0], -1)
    neg_ll = -jnp.sum(ll_mean, axis=1)
    ap = conc_p[0]
    sq, sp = qp_conc.sum(-1), ap.sum()
    kl_p = (gammaln(sq) - gammaln(sp)
            - jnp.sum(gammaln(qp_conc) - gammaln(ap)[None, :], axis=-1)
            + jnp.sum((qp_conc - ap[None, :])
                      * (digamma(qp_conc) - digamma(sq)[:, None]), axis=-1))

    def gkl(aq, bq, apc, bpr):
        return (apc * jnp.log(bq / bpr) + gammaln(apc) - gammaln(aq)
                + (aq - apc) * digamma(aq) + (bpr - bq) * aq / bq)

    kl_i = gkl(qi_c, qi_r, 1.0, 1.0)
    kl_bg = gkl(qbg_c, qbg_r, 1.0, 1.0)
    kl_terms = kl_p * s_prf + kl_bg * s_bg + kl_i * s_i
    total = (neg_ll + kl_terms).mean()
    return (total, neg_ll.mean(), kl_terms.mean(), kl_bg.mean(), kl_i.mean(), kl_p.mean())


if __name__ == "__main__":
    prior_shape = (3, 21, 21)
    P = prior_shape[0] * prior_shape[1] * prior_shape[2]      # 1323

    def make_inputs(key, B, S):
        ks = jax.random.split(key, 8)
        rate = jax.random.uniform(ks[0], (B, S, P), jnp.float32, 0.1, 5.0)
        counts = jnp.floor(jax.random.uniform(ks[1], (B, P), jnp.float32, 0.0, 10.0))
        mask = (jax.random.uniform(ks[2], (B, P, 1), jnp.float32) > 0.05
                ).astype(jnp.float32)
        qp = jax.random.uniform(ks[3], (B, P), jnp.float32, 0.1, 3.0)
        qi_c = jax.random.uniform(ks[4], (B,), jnp.float32, 0.5, 4.0)
        qi_r = jax.random.uniform(ks[5], (B,), jnp.float32, 0.5, 4.0)
        qbg_c = jax.random.uniform(ks[6], (B,), jnp.float32, 0.5, 4.0)
        qbg_r = jax.random.uniform(ks[7], (B,), jnp.float32, 0.5, 4.0)
        return rate, counts, qp, qi_c, qi_r, qbg_c, qbg_r, mask

    loss = PallasLoss(prior_shape=prior_shape)
    fwd = jax.jit(loss.forward)

    key = jax.random.PRNGKey(0)
    # (2, 8): divisible path.  (3, 7): exercises S-padding + analytic correction.
    for (B, S) in ((2, 8), (3, 7)):
        args = make_inputs(jax.random.fold_in(key, 17 * B + S), B, S)
        out = jax.block_until_ready(fwd(*args))
        ref = _ref_forward(*args, loss.concentration, eps=loss.eps)
        for got, want in zip(out[:6], ref):
            g, w = float(got), float(want)
            assert abs(g - w) <= 1e-2 + 1e-2 * abs(w), (B, S, g, w)
        assert all(math.isfinite(float(v)) for v in out)

    print("KERNEL_OK")
</pallas_src>

<mosaic_0001>
module attributes {stable_mosaic.version = 11 : i64} {
  func.func @_loss_kernel(%arg0: i32, %arg1: i32, %arg2: memref<2x8x1323xf32, #tpu.memory_space<vmem>>, %arg3: memref<2x1323xf32, #tpu.memory_space<vmem>>, %arg4: memref<2x1323xf32, #tpu.memory_space<vmem>>, %arg5: memref<2x1xf32, #tpu.memory_space<vmem>>, %arg6: memref<2x1323xf32, #tpu.memory_space<vmem>>, %arg7: memref<2x1xf32, #tpu.memory_space<vmem>>, %arg8: memref<2x1xf32, #tpu.memory_space<vmem>>) attributes {dimension_semantics = [#tpu.dimension_semantics<parallel>, #tpu.dimension_semantics<arbitrary>], iteration_bounds = array<i64: 1, 1>, scalar_prefetch = 0 : i64, scratch_operands = 0 : i64, tpu.core_type = #tpu.core_type<tc>, window_params = [{transform_indices = @transform_0, window_bounds = array<i64: 2, 8, 1323>}, {transform_indices = @transform_1, window_bounds = array<i64: 2, 1323>}, {transform_indices = @transform_2, window_bounds = array<i64: 2, 1323>}, {transform_indices = @transform_3, window_bounds = array<i64: 2, 1>}, {transform_indices = @transform_4, window_bounds = array<i64: 2, 1323>}, {transform_indices = @transform_5, window_bounds = array<i64: 2, 1>}, {transform_indices = @transform_6, window_bounds = array<i64: 2, 1>}]} {
    %c0_i32 = arith.constant 0 : i32
    %0 = arith.cmpi eq, %arg1, %c0_i32 : i32
    %1 = arith.extui %0 : i1 to i32
    %c0_i32_0 = arith.constant 0 : i32
    %2 = arith.cmpi ne, %1, %c0_i32_0 : i32
    scf.if %2 {
      %cst_17 = arith.constant 0.000000e+00 : f32
      %28 = vector.broadcast %cst_17 : f32 to vector<2x1xf32>
      %c0_18 = arith.constant 0 : index
      %c0_19 = arith.constant 0 : index
      %29 = vector.load %arg7[%c0_18, %c0_19] : memref<2x1xf32, #tpu.memory_space<vmem>>, vector<2x1xf32>
      tpu.vector_store %arg7[%c0_18, %c0_19], %28 {strides = array<i32>} : memref<2x1xf32, #tpu.memory_space<vmem>>, vector<2x1xf32>,
    } else {
    }
    %c0 = arith.constant 0 : index
    %c0_1 = arith.constant 0 : index
    %3 = vector.load %arg3[%c0, %c0_1] : memref<2x1323xf32, #tpu.memory_space<vmem>>, vector<2x1323xf32>
    %c0_2 = arith.constant 0 : index
    %c0_3 = arith.constant 0 : index
    %4 = vector.load %arg4[%c0_2, %c0_3] : memref<2x1323xf32, #tpu.memory_space<vmem>>, vector<2x1323xf32>
    %cst = arith.constant 0.000000e+00 : f32
    %5 = vector.broadcast %cst : f32 to vector<2x1323xf32>
    %c0_i32_4 = arith.constant 0 : i32
    %c8_i32 = arith.constant 8 : i32
    %6 = arith.muli %c0_i32_4, %c8_i32 : i32
    %7 = tpu.assume_multiple %6, 8 : i32
    %c0_5 = arith.constant 0 : index
    %8 = arith.index_cast %7 : i32 to index
    %c0_6 = arith.constant 0 : index
    %9 = vector.load %arg2[%c0_5, %8, %c0_6] : memref<2x8x1323xf32, #tpu.memory_space<vmem>>, vector<2x8x1323xf32>
    %cst_7 = arith.constant 9.99999974E-6 : f32
    %10 = vector.broadcast %cst_7 : f32 to vector<2x8x1323xf32>
    %11 = arith.addf %9, %10 : vector<2x8x1323xf32>
    %12 = math.log %11 : vector<2x8x1323xf32>
    %cst_8 = arith.constant dense<0.000000e+00> : vector<2x1323xf32>
    %13 = vector.multi_reduction <add>, %12, %cst_8 [1] : vector<2x8x1323xf32> to vector<2x1323xf32>
    %14 = arith.addf %5, %13 : vector<2x1323xf32>
    %cst_9 = arith.constant dense<0.000000e+00> : vector<2x1323xf32>
    %15 = vector.multi_reduction <add>, %11, %cst_9 [1] : vector<2x8x1323xf32> to vector<2x1323xf32>
    %16 = arith.addf %5, %15 : vector<2x1323xf32>
    %c1_i32 = arith.constant 1 : i32
    %17 = arith.mulf %3, %14 : vector<2x1323xf32>
    %18 = arith.mulf %4, %16 : vector<2x1323xf32>
    %19 = arith.subf %17, %18 : vector<2x1323xf32>
    %c0_10 = arith.constant 0 : index
    %c0_11 = arith.constant 0 : index
    %20 = vector.load %arg7[%c0_10, %c0_11] : memref<2x1xf32, #tpu.memory_space<vmem>>, vector<2x1xf32>
    %cst_12 = arith.constant dense<0.000000e+00> : vector<2xf32>
    %21 = vector.multi_reduction <add>, %19, %cst_12 [1] : vector<2x1323xf32> to vector<2xf32>
    %22 = vector.shape_cast %21 : vector<2xf32> to vector<2x1xf32>
    %23 = arith.addf %20, %22 : vector<2x1xf32>
    %c0_13 = arith.constant 0 : index
    %c0_14 = arith.constant 0 : index
    %24 = vector.load %arg7[%c0_13, %c0_14] : memref<2x1xf32, #tpu.memory_space<vmem>>, vector<2x1xf32>
    tpu.vector_store %arg7[%c0_13, %c0_14], %23 {strides = array<i32>} : memref<2x1xf32, #tpu.memory_space<vmem>>, vector<2x1xf32>,
    %c0_i32_15 = arith.constant 0 : i32
    %25 = arith.cmpi eq, %arg1, %c0_i32_15 : i32
    %26 = arith.extui %25 : i1 to i32
    %c0_i32_16 = arith.constant 0 : i32
    %27 = arith.cmpi ne, %26, %c0_i32_16 : i32
    scf.if %27 {
      %c0_17 = arith.constant 0 : index
      %c0_18 = arith.constant 0 : index
      %28 = vector.load %arg5[%c0_17, %c0_18] : memref<2x1xf32, #tpu.memory_space<vmem>>, vector<2x1xf32>
      %c0_19 = arith.constant 0 : index
      %c0_20 = arith.constant 0 : index
      %29 = vector.load %arg7[%c0_19, %c0_20] : memref<2x1xf32, #tpu.memory_space<vmem>>, vector<2x1xf32>
      %cst_21 = arith.constant 1.250000e-01 : f32
      %30 = vector.broadcast %cst_21 : f32 to vector<2x1xf32>
      %31 = arith.mulf %29, %30 : vector<2x1xf32>
      %32 = arith.subf %28, %31 : vector<2x1xf32>
      %c0_22 = arith.constant 0 : index
      %c0_23 = arith.constant 0 : index
      %33 = vector.load %arg7[%c0_22, %c0_23] : memref<2x1xf32, #tpu.memory_space<vmem>>, vector<2x1xf32>
      tpu.vector_store %arg7[%c0_22, %c0_23], %32 {strides = array<i32>} : memref<2x1xf32, #tpu.memory_space<vmem>>, vector<2x1xf32>,
      %c0_24 = arith.constant 0 : index
      %c0_25 = arith.constant 0 : index
      %34 = vector.load %arg6[%c0_24, %c0_25] : memref<2x1323xf32, #tpu.memory_space<vmem>>, vector<2x1323xf32>
      %cst_26 = arith.constant dense<0.000000e+00> : vector<2xf32>
      %35 = vector.multi_reduction <add>, %34, %cst_26 [1] : vector<2x1323xf32> to vector<2xf32>
      %36 = vector.shape_cast %35 : vector<2xf32> to vector<2x1xf32>
      %cst_27 = arith.constant 0.000000e+00 : f32
      %37 = vector.broadcast %cst_27 : f32 to vector<2x1xf32>
      %cst_28 = arith.constant 8.000000e+00 : f32
      %38 = vector.broadcast %cst_28 : f32 to vector<2x1xf32>
      %39 = arith.cmpf olt, %36, %38 : vector<2x1xf32>
      %cst_29 = arith.constant 1.000000e+00 : f32
      %40 = vector.broadcast %cst_29 : f32 to vector<2x1xf32>
      %41 = arith.divf %40, %36 : vector<2x1xf32>
      %cst_30 = arith.constant 0.000000e+00 : f32
      %42 = vector.broadcast %cst_30 : f32 to vector<2x1xf32>
      %43 = arith.select %39, %41, %42 : vector<2x1xi1>, vector<2x1xf32>
      %44 = arith.addf %37, %43 : vector<2x1xf32>
      %cst_31 = arith.constant 1.000000e+00 : f32
      %45 = vector.broadcast %cst_31 : f32 to vector<2x1xf32>
      %46 = arith.addf %36, %45 : vector<2x1xf32>
      %47 = arith.select %39, %46, %36 : vector<2x1xi1>, vector<2x1xf32>
      %cst_32 = arith.constant 8.000000e+00 : f32
      %48 = vector.broadcast %cst_32 : f32 to vector<2x1xf32>
      %49 = arith.cmpf olt, %47, %48 : vector<2x1xf32>
      %cst_33 = arith.constant 1.000000e+00 : f32
      %50 = vector.broadcast %cst_33 : f32 to vector<2x1xf32>
      %51 = arith.divf %50, %47 : vector<2x1xf32>
      %cst_34 = arith.constant 0.000000e+00 : f32
      %52 = vector.broadcast %cst_34 : f32 to vector<2x1xf32>
      %53 = arith.select %49, %51, %52 : vector<2x1xi1>, vector<2x1xf32>
      %54 = arith.addf %44, %53 : vector<2x1xf32>
      %cst_35 = arith.constant 1.000000e+00 : f32
      %55 = vector.broadcast %cst_35 : f32 to vector<2x1xf32>
      %56 = arith.addf %47, %55 : vector<2x1xf32>
      %57 = arith.select %49, %56, %47 : vector<2x1xi1>, vector<2x1xf32>
      %cst_36 = arith.constant 8.000000e+00 : f32
      %58 = vector.broadcast %cst_36 : f32 to vector<2x1xf32>
      %59 = arith.cmpf olt, %57, %58 : vector<2x1xf32>
      %cst_37 = arith.constant 1.000000e+00 : f32
      %60 = vector.broadcast %cst_37 : f32 to vector<2x1xf32>
      %61 = arith.divf %60, %57 : vector<2x1xf32>
      %cst_38 = arith.constant 0.000000e+00 : f32
      %62 = vector.broadcast %cst_38 : f32 to vector<2x1xf32>
      %63 = arith.select %59, %61, %62 : vector<2x1xi1>, vector<2x1xf32>
      %64 = arith.addf %54, %63 : vector<2x1xf32>
      %cst_39 = arith.constant 1.000000e+00 : f32
      %65 = vector.broadcast %cst_39 : f32 to vector<2x1xf32>
      %66 = arith.addf %57, %65 : vector<2x1xf32>
      %67 = arith.select %59, %66, %57 : vector<2x1xi1>, vector<2x1xf32>
      %cst_40 = arith.constant 8.000000e+00 : f32
      %68 = vector.broadcast %cst_40 : f32 to vector<2x1xf32>
      %69 = arith.cmpf olt, %67, %68 : vector<2x1xf32>
      %cst_41 = arith.constant 1.000000e+00 : f32
      %70 = vector.broadcast %cst_41 : f32 to vector<2x1xf32>
      %71 = arith.divf %70, %67 : vector<2x1xf32>
      %cst_42 = arith.constant 0.000000e+00 : f32
      %72 = vector.broadcast %cst_42 : f32 to vector<2x1xf32>
      %73 = arith.select %69, %71, %72 : vector<2x1xi1>, vector<2x1xf32>
      %74 = arith.addf %64, %73 : vector<2x1xf32>
      %cst_43 = arith.constant 1.000000e+00 : f32
      %75 = vector.broadcast %cst_43 : f32 to vector<2x1xf32>
      %76 = arith.addf %67, %75 : vector<2x1xf32>
      %77 = arith.select %69, %76, %67 : vector<2x1xi1>, vector<2x1xf32>
      %cst_44 = arith.constant 8.000000e+00 : f32
      %78 = vector.broadcast %cst_44 : f32 to vector<2x1xf32>
      %79 = arith.cmpf olt, %77, %78 : vector<2x1xf32>
      %cst_45 = arith.constant 1.000000e+00 : f32
      %80 = vector.broadcast %cst_45 : f32 to vector<2x1xf32>
      %81 = arith.divf %80, %77 : vector<2x1xf32>
      %cst_46 = arith.constant 0.000000e+00 : f32
      %82 = vector.broadcast %cst_46 : f32 to vector<2x1xf32>
      %83 = arith.select %79, %81, %82 : vector<2x1xi1>, vector<2x1xf32>
      %84 = arith.addf %74, %83 : vector<2x1xf32>
      %cst_47 = arith.constant 1.000000e+00 : f32
      %85 = vector.broadcast %cst_47 : f32 to vector<2x1xf32>
      %86 = arith.addf %77, %85 : vector<2x1xf32>
      %87 = arith.select %79, %86, %77 : vector<2x1xi1>, vector<2x1xf32>
      %cst_48 = arith.constant 8.000000e+00 : f32
      %88 = vector.broadcast %cst_48 : f32 to vector<2x1xf32>
      %89 = arith.cmpf olt, %87, %88 : vector<2x1xf32>
      %cst_49 = arith.constant 1.000000e+00 : f32
      %90 = vector.broadcast %cst_49 : f32 to vector<2x1xf32>
      %91 = arith.divf %90, %87 : vector<2x1xf32>
      %cst_50 = arith.constant 0.000000e+00 : f32
      %92 = vector.broadcast %cst_50 : f32 to vector<2x1xf32>
      %93 = arith.select %89, %91, %92 : vector<2x1xi1>, vector<2x1xf32>
      %94 = arith.addf %84, %93 : vector<2x1xf32>
      %cst_51 = arith.constant 1.000000e+00 : f32
      %95 = vector.broadcast %cst_51 : f32 to vector<2x1xf32>
      %96 = arith.addf %87, %95 : vector<2x1xf32>
      %97 = arith.select %89, %96, %87 : vector<2x1xi1>, vector<2x1xf32>
      %cst_52 = arith.constant 8.000000e+00 : f32
      %98 = vector.broadcast %cst_52 : f32 to vector<2x1xf32>
      %99 = arith.cmpf olt, %97, %98 : vector<2x1xf32>
      %cst_53 = arith.constant 1.000000e+00 : f32
      %100 = vector.broadcast %cst_53 : f32 to vector<2x1xf32>
      %101 = arith.divf %100, %97 : vector<2x1xf32>
      %cst_54 = arith.constant 0.000000e+00 : f32
      %102 = vector.broadcast %cst_54 : f32 to vector<2x1xf32>
      %103 = arith.select %99, %101, %102 : vector<2x1xi1>, vector<2x1xf32>
      %104 = arith.addf %94, %103 : vector<2x1xf32>
      %cst_55 = arith.constant 1.000000e+00 : f32
      %105 = vector.broadcast %cst_55 : f32 to vector<2x1xf32>
      %106 = arith.addf %97, %105 : vector<2x1xf32>
      %107 = arith.select %99, %106, %97 : vector<2x1xi1>, vector<2x1xf32>
      %cst_56 = arith.constant 8.000000e+00 : f32
      %108 = vector.broadcast %cst_56 : f32 to vector<2x1xf32>
      %109 = arith.cmpf olt, %107, %108 : vector<2x1xf32>
      %cst_57 = arith.constant 1.000000e+00 : f32
      %110 = vector.broadcast %cst_57 : f32 to vector<2x1xf32>
      %111 = arith.divf %110, %107 : vector<2x1xf32>
      %cst_58 = arith.constant 0.000000e+00 : f32
      %112 = vector.broadcast %cst_58 : f32 to vector<2x1xf32>
      %113 = arith.select %109, %111, %112 : vector<2x1xi1>, vector<2x1xf32>
      %114 = arith.addf %104, %113 : vector<2x1xf32>
      %cst_59 = arith.constant 1.000000e+00 : f32
      %115 = vector.broadcast %cst_59 : f32 to vector<2x1xf32>
      %116 = arith.addf %107, %115 : vector<2x1xf32>
      %117 = arith.select %109, %116, %107 : vector<2x1xi1>, vector<2x1xf32>
      %118 = tpu.reciprocal %117 {approx = true} : vector<2x1xf32> -> vector<2x1xf32>
      %119 = arith.mulf %118, %118 : vector<2x1xf32>
      %cst_60 = arith.constant -0.0039682542 : f32
      %120 = vector.broadcast %cst_60 : f32 to vector<2x1xf32>
      %121 = arith.mulf %119, %120 : vector<2x1xf32>
      %cst_61 = arith.constant 0.00833333377 : f32
      %122 = vector.broadcast %cst_61 : f32 to vector<2x1xf32>
      %123 = arith.addf %122, %121 : vector<2x1xf32>
      %124 = arith.mulf %119, %123 : vector<2x1xf32>
      %cst_62 = arith.constant -0.0833333358 : f32
      %125 = vector.broadcast %cst_62 : f32 to vector<2x1xf32>
      %126 = arith.addf %125, %124 : vector<2x1xf32>
      %127 = arith.mulf %119, %126 : vector<2x1xf32>
      %128 = math.log %117 : vector<2x1xf32>
      %cst_63 = arith.constant 5.000000e-01 : f32
      %129 = vector.broadcast %cst_63 : f32 to vector<2x1xf32>
      %130 = arith.mulf %129, %118 : vector<2x1xf32>
      %131 = arith.subf %128, %130 : vector<2x1xf32>
      %132 = arith.addf %131, %127 : vector<2x1xf32>
      %133 = arith.subf %132, %114 : vector<2x1xf32>
      %cst_64 = arith.constant 1.000000e+00 : f32
      %134 = vector.broadcast %cst_64 : f32 to vector<2x1323xf32>
      %cst_65 = arith.constant 8.000000e+00 : f32
      %135 = vector.broadcast %cst_65 : f32 to vector<2x1323xf32>
      %136 = arith.cmpf olt, %34, %135 : vector<2x1323xf32>
      %cst_66 = arith.constant 1.000000e+00 : f32
      %137 = vector.broadcast %cst_66 : f32 to vector<2x1323xf32>
      %138 = arith.select %136, %34, %137 : vector<2x1323xi1>, vector<2x1323xf32>
      %139 = arith.mulf %134, %138 : vector<2x1323xf32>
      %cst_67 = arith.constant 1.000000e+00 : f32
      %140 = vector.broadcast %cst_67 : f32 to vector<2x1323xf32>
      %141 = arith.addf %34, %140 : vector<2x1323xf32>
      %142 = arith.select %136, %141, %34 : vector<2x1323xi1>, vector<2x1323xf32>
      %cst_68 = arith.constant 8.000000e+00 : f32
      %143 = vector.broadcast %cst_68 : f32 to vector<2x1323xf32>
      %144 = arith.cmpf olt, %142, %143 : vector<2x1323xf32>
      %cst_69 = arith.constant 1.000000e+00 : f32
      %145 = vector.broadcast %cst_69 : f32 to vector<2x1323xf32>
      %146 = arith.select %144, %142, %145 : vector<2x1323xi1>, vector<2x1323xf32>
      %147 = arith.mulf %139, %146 : vector<2x1323xf32>
      %cst_70 = arith.constant 1.000000e+00 : f32
      %148 = vector.broadcast %cst_70 : f32 to vector<2x1323xf32>
      %149 = arith.addf %142, %148 : vector<2x1323xf32>
      %150 = arith.select %144, %149, %142 : vector<2x1323xi1>, vector<2x1323xf32>
      %cst_71 = arith.constant 8.000000e+00 : f32
      %151 = vector.broadcast %cst_71 : f32 to vector<2x1323xf32>
      %152 = arith.cmpf olt, %150, %151 : vector<2x1323xf32>
      %cst_72 = arith.constant 1.000000e+00 : f32
      %153 = vector.broadcast %cst_72 : f32 to vector<2x1323xf32>
      %154 = arith.select %152, %150, %153 : vector<2x1323xi1>, vector<2x1323xf32>
      %155 = arith.mulf %147, %154 : vector<2x1323xf32>
      %cst_73 = arith.constant 1.000000e+00 : f32
      %156 = vector.broadcast %cst_73 : f32 to vector<2x1323xf32>
      %157 = arith.addf %150, %156 : vector<2x1323xf32>
      %158 = arith.select %152, %157, %150 : vector<2x1323xi1>, vector<2x1323xf32>
      %cst_74 = arith.constant 8.000000e+00 : f32
      %159 = vector.broadcast %cst_74 : f32 to vector<2x1323xf32>
      %160 = arith.cmpf olt, %158, %159 : vector<2x1323xf32>
      %cst_75 = arith.constant 1.000000e+00 : f32
      %161 = vector.broadcast %cst_75 : f32 to vector<2x1323xf32>
      %162 = arith.select %160, %158, %161 : vector<2x1323xi1>, vector<2x1323xf32>
      %163 = arith.mulf %155, %162 : vector<2x1323xf32>
      %cst_76 = arith.constant 1.000000e+00 : f32
      %164 = vector.broadcast %cst_76 : f32 to vector<2x1323xf32>
      %165 = arith.addf %158, %164 : vector<2x1323xf32>
      %166 = arith.select %160, %165, %158 : vector<2x1323xi1>, vector<2x1323xf32>
      %cst_77 = arith.constant 8.000000e+00 : f32
      %167 = vector.broadcast %cst_77 : f32 to vector<2x1323xf32>
      %168 = arith.cmpf olt, %166, %167 : vector<2x1323xf32>
      %cst_78 = arith.constant 1.000000e+00 : f32
      %169 = vector.broadcast %cst_78 : f32 to vector<2x1323xf32>
      %170 = arith.select %168, %166, %169 : vector<2x1323xi1>, vector<2x1323xf32>
      %171 = arith.mulf %163, %170 : vector<2x1323xf32>
      %cst_79 = arith.constant 1.000000e+00 : f32
      %172 = vector.broadcast %cst_79 : f32 to vector<2x1323xf32>
      %173 = arith.addf %166, %172 : vector<2x1323xf32>
      %174 = arith.select %168, %173, %166 : vector<2x1323xi1>, vector<2x1323xf32>
      %cst_80 = arith.constant 8.000000e+00 : f32
      %175 = vector.broadcast %cst_80 : f32 to vector<2x1323xf32>
      %176 = arith.cmpf olt, %174, %175 : vector<2x1323xf32>
      %cst_81 = arith.constant 1.000000e+00 : f32
      %177 = vector.broadcast %cst_81 : f32 to vector<2x1323xf32>
      %178 = arith.select %176, %174, %177 : vector<2x1323xi1>, vector<2x1323xf32>
      %179 = arith.mulf %171, %178 : vector<2x1323xf32>
      %cst_82 = arith.constant 1.000000e+00 : f32
      %180 = vector.broadcast %cst_82 : f32 to vector<2x1323xf32>
      %181 = arith.addf %174, %180 : vector<2x1323xf32>
      %182 = arith.select %176, %181, %174 : vector<2x1323xi1>, vector<2x1323xf32>
      %cst_83 = arith.constant 8.000000e+00 : f32
      %183 = vector.broadcast %cst_83 : f32 to vector<2x1323xf32>
      %184 = arith.cmpf olt, %182, %183 : vector<2x1323xf32>
      %cst_84 = arith.constant 1.000000e+00 : f32
      %185 = vector.broadcast %cst_84 : f32 to vector<2x1323xf32>
      %186 = arith.select %184, %182, %185 : vector<2x1323xi1>, vector<2x1323xf32>
      %187 = arith.mulf %179, %186 : vector<2x1323xf32>
      %cst_85 = arith.constant 1.000000e+00 : f32
      %188 = vector.broadcast %cst_85 : f32 to vector<2x1323xf32>
      %189 = arith.addf %182, %188 : vector<2x1323xf32>
      %190 = arith.select %184, %189, %182 : vector<2x1323xi1>, vector<2x1323xf32>
      %cst_86 = arith.constant 8.000000e+00 : f32
      %191 = vector.broadcast %cst_86 : f32 to vector<2x1323xf32>
      %192 = arith.cmpf olt, %190, %191 : vector<2x1323xf32>
      %cst_87 = arith.constant 1.000000e+00 : f32
      %193 = vector.broadcast %cst_87 : f32 to vector<2x1323xf32>
      %194 = arith.select %192, %190, %193 : vector<2x1323xi1>, vector<2x1323xf32>
      %195 = arith.mulf %187, %194 : vector<2x1323xf32>
      %cst_88 = arith.constant 1.000000e+00 : f32
      %196 = vector.broadcast %cst_88 : f32 to vector<2x1323xf32>
      %197 = arith.addf %190, %196 : vector<2x1323xf32>
      %198 = arith.select %192, %197, %190 : vector<2x1323xi1>, vector<2x1323xf32>
      %199 = tpu.reciprocal %198 {approx = true} : vector<2x1323xf32> -> vector<2x1323xf32>
      %200 = arith.mulf %199, %199 : vector<2x1323xf32>
      %cst_89 = arith.constant -5.95238118E-4 : f32
      %201 = vector.broadcast %cst_89 : f32 to vector<2x1323xf32>
      %202 = arith.mulf %200, %201 : vector<2x1323xf32>
      %cst_90 = arith.constant 7.93650805E-4 : f32
      %203 = vector.broadcast %cst_90 : f32 to vector<2x1323xf32>
      %204 = arith.addf %203, %202 : vector<2x1323xf32>
      %205 = arith.mulf %200, %204 : vector<2x1323xf32>
      %cst_91 = arith.constant -0.00277777785 : f32
      %206 = vector.broadcast %cst_91 : f32 to vector<2x1323xf32>
      %207 = arith.addf %206, %205 : vector<2x1323xf32>
      %208 = arith.mulf %200, %207 : vector<2x1323xf32>
      %cst_92 = arith.constant 0.0833333358 : f32
      %209 = vector.broadcast %cst_92 : f32 to vector<2x1323xf32>
      %210 = arith.addf %209, %208 : vector<2x1323xf32>
      %211 = arith.mulf %199, %210 : vector<2x1323xf32>
      %cst_93 = arith.constant 5.000000e-01 : f32
      %212 = vector.broadcast %cst_93 : f32 to vector<2x1323xf32>
      %213 = arith.subf %198, %212 : vector<2x1323xf32>
      %214 = math.log %198 : vector<2x1323xf32>
      %215 = arith.mulf %213, %214 : vector<2x1323xf32>
      %216 = arith.subf %215, %198 : vector<2x1323xf32>
      %cst_94 = arith.constant 0.918938517 : f32
      %217 = vector.broadcast %cst_94 : f32 to vector<2x1323xf32>
      %218 = arith.addf %216, %217 : vector<2x1323xf32>
      %219 = arith.addf %218, %211 : vector<2x1323xf32>
      %220 = math.log %195 : vector<2x1323xf32>
      %221 = arith.subf %219, %220 : vector<2x1323xf32>
      %cst_95 = arith.constant dense<0.000000e+00> : vector<2xf32>
      %222 = vector.multi_reduction <add>, %221, %cst_95 [1] : vector<2x1323xf32> to vector<2xf32>
      %223 = vector.shape_cast %222 : vector<2xf32> to vector<2x1xf32>
      %cst_96 = arith.constant 0.000000e+00 : f32
      %224 = vector.broadcast %cst_96 : f32 to vector<2x1xf32>
      %225 = arith.subf %223, %224 : vector<2x1xf32>
      %cst_97 = arith.constant 1.000000e+00 : f32
      %226 = vector.broadcast %cst_97 : f32 to vector<2x1323xf32>
      %227 = arith.subf %34, %226 : vector<2x1323xf32>
      %cst_98 = arith.constant 0.000000e+00 : f32
      %228 = vector.broadcast %cst_98 : f32 to vector<2x1323xf32>
      %cst_99 = arith.constant 8.000000e+00 : f32
      %229 = vector.broadcast %cst_99 : f32 to vector<2x1323xf32>
      %230 = arith.cmpf olt, %34, %229 : vector<2x1323xf32>
      %cst_100 = arith.constant 1.000000e+00 : f32
      %231 = vector.broadcast %cst_100 : f32 to vector<2x1323xf32>
      %232 = arith.divf %231, %34 : vector<2x1323xf32>
      %cst_101 = arith.constant 0.000000e+00 : f32
      %233 = vector.broadcast %cst_101 : f32 to vector<2x1323xf32>
      %234 = arith.select %230, %232, %233 : vector<2x1323xi1>, vector<2x1323xf32>
      %235 = arith.addf %228, %234 : vector<2x1323xf32>
      %cst_102 = arith.constant 1.000000e+00 : f32
      %236 = vector.broadcast %cst_102 : f32 to vector<2x1323xf32>
      %237 = arith.addf %34, %236 : vector<2x1323xf32>
      %238 = arith.select %230, %237, %34 : vector<2x1323xi1>, vector<2x1323xf32>
      %cst_103 = arith.constant 8.000000e+00 : f32
      %239 = vector.broadcast %cst_103 : f32 to vector<2x1323xf32>
      %240 = arith.cmpf olt, %238, %239 : vector<2x1323xf32>
      %cst_104 = arith.constant 1.000000e+00 : f32
      %241 = vector.broadcast %cst_104 : f32 to vector<2x1323xf32>
      %242 = arith.divf %241, %238 : vector<2x1323xf32>
      %cst_105 = arith.constant 0.000000e+00 : f32
      %243 = vector.broadcast %cst_105 : f32 to vector<2x1323xf32>
      %244 = arith.select %240, %242, %243 : vector<2x1323xi1>, vector<2x1323xf32>
      %245 = arith.addf %235, %244 : vector<2x1323xf32>
      %cst_106 = arith.constant 1.000000e+00 : f32
      %246 = vector.broadcast %cst_106 : f32 to vector<2x1323xf32>
      %247 = arith.addf %238, %246 : vector<2x1323xf32>
      %248 = arith.select %240, %247, %238 : vector<2x1323xi1>, vector<2x1323xf32>
      %cst_107 = arith.constant 8.000000e+00 : f32
      %249 = vector.broadcast %cst_107 : f32 to vector<2x1323xf32>
      %250 = arith.cmpf olt, %248, %249 : vector<2x1323xf32>
      %cst_108 = arith.constant 1.000000e+00 : f32
      %251 = vector.broadcast %cst_108 : f32 to vector<2x1323xf32>
      %252 = arith.divf %251, %248 : vector<2x1323xf32>
      %cst_109 = arith.constant 0.000000e+00 : f32
      %253 = vector.broadcast %cst_109 : f32 to vector<2x1323xf32>
      %254 = arith.select %250, %252, %253 : vector<2x1323xi1>, vector<2x1323xf32>
      %255 = arith.addf %245, %254 : vector<2x1323xf32>
      %cst_110 = arith.constant 1.000000e+00 : f32
      %256 = vector.broadcast %cst_110 : f32 to vector<2x1323xf32>
      %257 = arith.addf %248, %256 : vector<2x1323xf32>
      %258 = arith.select %250, %257, %248 : vector<2x1323xi1>, vector<2x1323xf32>
      %cst_111 = arith.constant 8.000000e+00 : f32
      %259 = vector.broadcast %cst_111 : f32 to vector<2x1323xf32>
      %260 = arith.cmpf olt, %258, %259 : vector<2x1323xf32>
      %cst_112 = arith.constant 1.000000e+00 : f32
      %261 = vector.broadcast %cst_112 : f32 to vector<2x1323xf32>
      %262 = arith.divf %261, %258 : vector<2x1323xf32>
      %cst_113 = arith.constant 0.000000e+00 : f32
      %263 = vector.broadcast %cst_113 : f32 to vector<2x1323xf32>
      %264 = arith.select %260, %262, %263 : vector<2x1323xi1>, vector<2x1323xf32>
      %265 = arith.addf %255, %264 : vector<2x1323xf32>
      %cst_114 = arith.constant 1.000000e+00 : f32
      %266 = vector.broadcast %cst_114 : f32 to vector<2x1323xf32>
      %267 = arith.addf %258, %266 : vector<2x1323xf32>
      %268 = arith.select %260, %267, %258 : vector<2x1323xi1>, vector<2x1323xf32>
      %cst_115 = arith.constant 8.000000e+00 : f32
      %269 = vector.broadcast %cst_115 : f32 to vector<2x1323xf32>
      %270 = arith.cmpf olt, %268, %269 : vector<2x1323xf32>
      %cst_116 = arith.constant 1.000000e+00 : f32
      %271 = vector.broadcast %cst_116 : f32 to vector<2x1323xf32>
      %272 = arith.divf %271, %268 : vector<2x1323xf32>
      %cst_117 = arith.constant 0.000000e+00 : f32
      %273 = vector.broadcast %cst_117 : f32 to vector<2x1323xf32>
      %274 = arith.select %270, %272, %273 : vector<2x1323xi1>, vector<2x1323xf32>
      %275 = arith.addf %265, %274 : vector<2x1323xf32>
      %cst_118 = arith.constant 1.000000e+00 : f32
      %276 = vector.broadcast %cst_118 : f32 to vector<2x1323xf32>
      %277 = arith.addf %268, %276 : vector<2x1323xf32>
      %278 = arith.select %270, %277, %268 : vector<2x1323xi1>, vector<2x1323xf32>
      %cst_119 = arith.constant 8.000000e+00 : f32
      %279 = vector.broadcast %cst_119 : f32 to vector<2x1323xf32>
      %280 = arith.cmpf olt, %278, %279 : vector<2x1323xf32>
      %cst_120 = arith.constant 1.000000e+00 : f32
      %281 = vector.broadcast %cst_120 : f32 to vector<2x1323xf32>
      %282 = arith.divf %281, %278 : vector<2x1323xf32>
      %cst_121 = arith.constant 0.000000e+00 : f32
      %283 = vector.broadcast %cst_121 : f32 to vector<2x1323xf32>
      %284 = arith.select %280, %282, %283 : vector<2x1323xi1>, vector<2x1323xf32>
      %285 = arith.addf %275, %284 : vector<2x1323xf32>
      %cst_122 = arith.constant 1.000000e+00 : f32
      %286 = vector.broadcast %cst_122 : f32 to vector<2x1323xf32>
      %287 = arith.addf %278, %286 : vector<2x1323xf32>
      %288 = arith.select %280, %287, %278 : vector<2x1323xi1>, vector<2x1323xf32>
      %cst_123 = arith.constant 8.000000e+00 : f32
      %289 = vector.broadcast %cst_123 : f32 to vector<2x1323xf32>
      %290 = arith.cmpf olt, %288, %289 : vector<2x1323xf32>
      %cst_124 = arith.constant 1.000000e+00 : f32
      %291 = vector.broadcast %cst_124 : f32 to vector<2x1323xf32>
      %292 = arith.divf %291, %288 : vector<2x1323xf32>
      %cst_125 = arith.constant 0.000000e+00 : f32
      %293 = vector.broadcast %cst_125 : f32 to vector<2x1323xf32>
      %294 = arith.select %290, %292, %293 : vector<2x1323xi1>, vector<2x1323xf32>
      %295 = arith.addf %285, %294 : vector<2x1323xf32>
      %cst_126 = arith.constant 1.000000e+00 : f32
      %296 = vector.broadcast %cst_126 : f32 to vector<2x1323xf32>
      %297 = arith.addf %288, %296 : vector<2x1323xf32>
      %298 = arith.select %290, %297, %288 : vector<2x1323xi1>, vector<2x1323xf32>
      %cst_127 = arith.constant 8.000000e+00 : f32
      %299 = vector.broadcast %cst_127 : f32 to vector<2x1323xf32>
      %300 = arith.cmpf olt, %298, %299 : vector<2x1323xf32>
      %cst_128 = arith.constant 1.000000e+00 : f32
      %301 = vector.broadcast %cst_128 : f32 to vector<2x1323xf32>
      %302 = arith.divf %301, %298 : vector<2x1323xf32>
      %cst_129 = arith.constant 0.000000e+00 : f32
      %303 = vector.broadcast %cst_129 : f32 to vector<2x1323xf32>
      %304 = arith.select %300, %302, %303 : vector<2x1323xi1>, vector<2x1323xf32>
      %305 = arith.addf %295, %304 : vector<2x1323xf32>
      %cst_130 = arith.constant 1.000000e+00 : f32
      %306 = vector.broadcast %cst_130 : f32 to vector<2x1323xf32>
      %307 = arith.addf %298, %306 : vector<2x1323xf32>
      %308 = arith.select %300, %307, %298 : vector<2x1323xi1>, vector<2x1323xf32>
      %309 = tpu.reciprocal %308 {approx = true} : vector<2x1323xf32> -> vector<2x1323xf32>
      %310 = arith.mulf %309, %309 : vector<2x1323xf32>
      %cst_131 = arith.constant -0.0039682542 : f32
      %311 = vector.broadcast %cst_131 : f32 to vector<2x1323xf32>
      %312 = arith.mulf %310, %311 : vector<2x1323xf32>
      %cst_132 = arith.constant 0.00833333377 : f32
      %313 = vector.broadcast %cst_132 : f32 to vector<2x1323xf32>
      %314 = arith.addf %313, %312 : vector<2x1323xf32>
      %315 = arith.mulf %310, %314 : vector<2x1323xf32>
      %cst_133 = arith.constant -0.0833333358 : f32
      %316 = vector.broadcast %cst_133 : f32 to vector<2x1323xf32>
      %317 = arith.addf %316, %315 : vector<2x1323xf32>
      %318 = arith.mulf %310, %317 : vector<2x1323xf32>
      %319 = math.log %308 : vector<2x1323xf32>
      %cst_134 = arith.constant 5.000000e-01 : f32
      %320 = vector.broadcast %cst_134 : f32 to vector<2x1323xf32>
      %321 = arith.mulf %320, %309 : vector<2x1323xf32>
      %322 = arith.subf %319, %321 : vector<2x1323xf32>
      %323 = arith.addf %322, %318 : vector<2x1323xf32>
      %324 = arith.subf %323, %305 : vector<2x1323xf32>
      %325 = vector.broadcast %133 : vector<2x1xf32> to vector<2x1323xf32>
      %326 = arith.subf %324, %325 : vector<2x1323xf32>
      %327 = arith.mulf %227, %326 : vector<2x1323xf32>
      %cst_135 = arith.constant dense<0.000000e+00> : vector<2xf32>
      %328 = vector.multi_reduction <add>, %327, %cst_135 [1] : vector<2x1323xf32> to vector<2xf32>
      %329 = vector.shape_cast %328 : vector<2xf32> to vector<2x1xf32>
      %cst_136 = arith.constant 1.000000e+00 : f32
      %330 = vector.broadcast %cst_136 : f32 to vector<2x1xf32>
      %cst_137 = arith.constant 8.000000e+00 : f32
      %331 = vector.broadcast %cst_137 : f32 to vector<2x1xf32>
      %332 = arith.cmpf olt, %36, %331 : vector<2x1xf32>
      %cst_138 = arith.constant 1.000000e+00 : f32
      %333 = vector.broadcast %cst_138 : f32 to vector<2x1xf32>
      %334 = arith.select %332, %36, %333 : vector<2x1xi1>, vector<2x1xf32>
      %335 = arith.mulf %330, %334 : vector<2x1xf32>
      %cst_139 = arith.constant 1.000000e+00 : f32
      %336 = vector.broadcast %cst_139 : f32 to vector<2x1xf32>
      %337 = arith.addf %36, %336 : vector<2x1xf32>
      %338 = arith.select %332, %337, %36 : vector<2x1xi1>, vector<2x1xf32>
      %cst_140 = arith.constant 8.000000e+00 : f32
      %339 = vector.broadcast %cst_140 : f32 to vector<2x1xf32>
      %340 = arith.cmpf olt, %338, %339 : vector<2x1xf32>
      %cst_141 = arith.constant 1.000000e+00 : f32
      %341 = vector.broadcast %cst_141 : f32 to vector<2x1xf32>
      %342 = arith.select %340, %338, %341 : vector<2x1xi1>, vector<2x1xf32>
      %343 = arith.mulf %335, %342 : vector<2x1xf32>
      %cst_142 = arith.constant 1.000000e+00 : f32
      %344 = vector.broadcast %cst_142 : f32 to vector<2x1xf32>
      %345 = arith.addf %338, %344 : vector<2x1xf32>
      %346 = arith.select %340, %345, %338 : vector<2x1xi1>, vector<2x1xf32>
      %cst_143 = arith.constant 8.000000e+00 : f32
      %347 = vector.broadcast %cst_143 : f32 to vector<2x1xf32>
      %348 = arith.cmpf olt, %346, %347 : vector<2x1xf32>
      %cst_144 = arith.constant 1.000000e+00 : f32
      %349 = vector.broadcast %cst_144 : f32 to vector<2x1xf32>
      %350 = arith.select %348, %346, %349 : vector<2x1xi1>, vector<2x1xf32>
      %351 = arith.mulf %343, %350 : vector<2x1xf32>
      %cst_145 = arith.constant 1.000000e+00 : f32
      %352 = vector.broadcast %cst_145 : f32 to vector<2x1xf32>
      %353 = arith.addf %346, %352 : vector<2x1xf32>
      %354 = arith.select %348, %353, %346 : vector<2x1xi1>, vector<2x1xf32>
      %cst_146 = arith.constant 8.000000e+00 : f32
      %355 = vector.broadcast %cst_146 : f32 to vector<2x1xf32>
      %356 = arith.cmpf olt, %354, %355 : vector<2x1xf32>
      %cst_147 = arith.constant 1.000000e+00 : f32
      %357 = vector.broadcast %cst_147 : f32 to vector<2x1xf32>
      %358 = arith.select %356, %354, %357 : vector<2x1xi1>, vector<2x1xf32>
      %359 = arith.mulf %351, %358 : vector<2x1xf32>
      %cst_148 = arith.constant 1.000000e+00 : f32
      %360 = vector.broadcast %cst_148 : f32 to vector<2x1xf32>
      %361 = arith.addf %354, %360 : vector<2x1xf32>
      %362 = arith.select %356, %361, %354 : vector<2x1xi1>, vector<2x1xf32>
      %cst_149 = arith.constant 8.000000e+00 : f32
      %363 = vector.broadcast %cst_149 : f32 to vector<2x1xf32>
      %364 = arith.cmpf olt, %362, %363 : vector<2x1xf32>
      %cst_150 = arith.constant 1.000000e+00 : f32
      %365 = vector.broadcast %cst_150 : f32 to vector<2x1xf32>
      %366 = arith.select %364, %362, %365 : vector<2x1xi1>, vector<2x1xf32>
      %367 = arith.mulf %359, %366 : vector<2x1xf32>
      %cst_151 = arith.constant 1.000000e+00 : f32
      %368 = vector.broadcast %cst_151 : f32 to vector<2x1xf32>
      %369 = arith.addf %362, %368 : vector<2x1xf32>
      %370 = arith.select %364, %369, %362 : vector<2x1xi1>, vector<2x1xf32>
      %cst_152 = arith.constant 8.000000e+00 : f32
      %371 = vector.broadcast %cst_152 : f32 to vector<2x1xf32>
      %372 = arith.cmpf olt, %370, %371 : vector<2x1xf32>
      %cst_153 = arith.constant 1.000000e+00 : f32
      %373 = vector.broadcast %cst_153 : f32 to vector<2x1xf32>
      %374 = arith.select %372, %370, %373 : vector<2x1xi1>, vector<2x1xf32>
      %375 = arith.mulf %367, %374 : vector<2x1xf32>
      %cst_154 = arith.constant 1.000000e+00 : f32
      %376 = vector.broadcast %cst_154 : f32 to vector<2x1xf32>
      %377 = arith.addf %370, %376 : vector<2x1xf32>
      %378 = arith.select %372, %377, %370 : vector<2x1xi1>, vector<2x1xf32>
      %cst_155 = arith.constant 8.000000e+00 : f32
      %379 = vector.broadcast %cst_155 : f32 to vector<2x1xf32>
      %380 = arith.cmpf olt, %378, %379 : vector<2x1xf32>
      %cst_156 = arith.constant 1.000000e+00 : f32
      %381 = vector.broadcast %cst_156 : f32 to vector<2x1xf32>
      %382 = arith.select %380, %378, %381 : vector<2x1xi1>, vector<2x1xf32>
      %383 = arith.mulf %375, %382 : vector<2x1xf32>
      %cst_157 = arith.constant 1.000000e+00 : f32
      %384 = vector.broadcast %cst_157 : f32 to vector<2x1xf32>
      %385 = arith.addf %378, %384 : vector<2x1xf32>
      %386 = arith.select %380, %385, %378 : vector<2x1xi1>, vector<2x1xf32>
      %cst_158 = arith.constant 8.000000e+00 : f32
      %387 = vector.broadcast %cst_158 : f32 to vector<2x1xf32>
      %388 = arith.cmpf olt, %386, %387 : vector<2x1xf32>
      %cst_159 = arith.constant 1.000000e+00 : f32
      %389 = vector.broadcast %cst_159 : f32 to vector<2x1xf32>
      %390 = arith.select %388, %386, %389 : vector<2x1xi1>, vector<2x1xf32>
      %391 = arith.mulf %383, %390 : vector<2x1xf32>
      %cst_160 = arith.constant 1.000000e+00 : f32
      %392 = vector.broadcast %cst_160 : f32 to vector<2x1xf32>
      %393 = arith.addf %386, %392 : vector<2x1xf32>
      %394 = arith.select %388, %393, %386 : vector<2x1xi1>, vector<2x1xf32>
      %395 = tpu.reciprocal %394 {approx = true} : vector<2x1xf32> -> vector<2x1xf32>
      %396 = arith.mulf %395, %395 : vector<2x1xf32>
      %cst_161 = arith.constant -5.95238118E-4 : f32
      %397 = vector.broadcast %cst_161 : f32 to vector<2x1xf32>
      %398 = arith.mulf %396, %397 : vector<2x1xf32>
      %cst_162 = arith.constant 7.93650805E-4 : f32
      %399 = vector.broadcast %cst_162 : f32 to vector<2x1xf32>
      %400 = arith.addf %399, %398 : vector<2x1xf32>
      %401 = arith.mulf %396, %400 : vector<2x1xf32>
      %cst_163 = arith.constant -0.00277777785 : f32
      %402 = vector.broadcast %cst_163 : f32 to vector<2x1xf32>
      %403 = arith.addf %402, %401 : vector<2x1xf32>
      %404 = arith.mulf %396, %403 : vector<2x1xf32>
      %cst_164 = arith.constant 0.0833333358 : f32
      %405 = vector.broadcast %cst_164 : f32 to vector<2x1xf32>
      %406 = arith.addf %405, %404 : vector<2x1xf32>
      %407 = arith.mulf %395, %406 : vector<2x1xf32>
      %cst_165 = arith.constant 5.000000e-01 : f32
      %408 = vector.broadcast %cst_165 : f32 to vector<2x1xf32>
      %409 = arith.subf %394, %408 : vector<2x1xf32>
      %410 = math.log %394 : vector<2x1xf32>
      %411 = arith.mulf %409, %410 : vector<2x1xf32>
      %412 = arith.subf %411, %394 : vector<2x1xf32>
      %cst_166 = arith.constant 0.918938517 : f32
      %413 = vector.broadcast %cst_166 : f32 to vector<2x1xf32>
      %414 = arith.addf %412, %413 : vector<2x1xf32>
      %415 = arith.addf %414, %407 : vector<2x1xf32>
      %416 = math.log %391 : vector<2x1xf32>
      %417 = arith.subf %415, %416 : vector<2x1xf32>
      %cst_167 = arith.constant 8183.5957 : f32
      %418 = vector.broadcast %cst_167 : f32 to vector<2x1xf32>
      %419 = arith.subf %417, %418 : vector<2x1xf32>
      %420 = arith.subf %419, %225 : vector<2x1xf32>
      %421 = arith.addf %420, %329 : vector<2x1xf32>
      %c0_168 = arith.constant 0 : index
      %c0_169 = arith.constant 0 : index
      %422 = vector.load %arg8[%c0_168, %c0_169] : memref<2x1xf32, #tpu.memory_space<vmem>>, vector<2x1xf32>
      tpu.vector_store %arg8[%c0_168, %c0_169], %421 {strides = array<i32>} : memref<2x1xf32, #tpu.memory_space<vmem>>, vector<2x1xf32>,
    } else {
    }
    return
  }
  func.func @transform_0(%arg0: i32, %arg1: i32) -> (i32, i32, i32) {
    %c0_i32 = arith.constant 0 : i32
    %c0_i32_0 = arith.constant 0 : i32
    return %arg0, %arg1, %c0_i32 : i32, i32, i32
  }
  func.func @transform_1(%arg0: i32, %arg1: i32) -> (i32, i32) {
    %c0_i32 = arith.constant 0 : i32
    %c0_i32_0 = arith.constant 0 : i32
    return %arg0, %c0_i32 : i32, i32
  }
  func.func @transform_2(%arg0: i32, %arg1: i32) -> (i32, i32) {
    %c0_i32 = arith.constant 0 : i32
    %c0_i32_0 = arith.constant 0 : i32
    return %arg0, %c0_i32 : i32, i32
  }
  func.func @transform_3(%arg0: i32, %arg1: i32) -> (i32, i32) {
    %c0_i32 = arith.constant 0 : i32
    %c0_i32_0 = arith.constant 0 : i32
    return %arg0, %c0_i32 : i32, i32
  }
  func.func @transform_4(%arg0: i32, %arg1: i32) -> (i32, i32) {
    %c0_i32 = arith.constant 0 : i32
    %c0_i32_0 = arith.constant 0 : i32
    return %arg0, %c0_i32 : i32, i32
  }
  func.func @transform_5(%arg0: i32, %arg1: i32) -> (i32, i32) {
    %c0_i32 = arith.constant 0 : i32
    %c0_i32_0 = arith.constant 0 : i32
    return %arg0, %c0_i32 : i32, i32
  }
  func.func @transform_6(%arg0: i32, %arg1: i32) -> (i32, i32) {
    %c0_i32 = arith.constant 0 : i32
    %c0_i32_0 = arith.constant 0 : i32
    return %arg0, %c0_i32 : i32, i32
  }
}

</mosaic_0001>

<llo_original>
// kernel: forward.1
$region0: #{forward.1}
  #allocation0 [shape = 'u32[]', space=smem, size = 0x4, offset = 0x4, fixed_abs, tag = 'smem constant byte address 0x4 - core index']
  #allocation1 [shape = 'u32[144,128]{1,0:T(1,128)}', space=vmem, size = 0x12000, scoped, tag = 'internal scratch']
  %s0 = inlined_call_operand.hbm [shape: f32[2,8,1323], index: 0, kind: input, shape index: {}]
  %s1 = inlined_call_operand.vmem [shape: f32[2,1323], index: 1, kind: input, shape index: {}]
  %s2 = inlined_call_operand.vmem [shape: f32[2,1323], index: 2, kind: input, shape index: {}]
  %s3 = inlined_call_operand.vmem [shape: f32[2,1], index: 3, kind: input, shape index: {}]
  %s4 = inlined_call_operand.vmem [shape: f32[2,1323], index: 4, kind: input, shape index: {}]
  %s5 = inlined_call_operand.vmem [shape: f32[2,1], index: 5, kind: output, shape index: {0}]
  %s6 = inlined_call_operand.vmem [shape: f32[2,1], index: 6, kind: output, shape index: {1}]
  %7 = xla_tuple %s5, %s6
  %s8 = sld [smem:[#allocation0]]
  $region50: #{forward.1} parent=0
    _
  %s10 = ssub.s32 1, %s8
  %s11 = scalar_select 0, %s10, %s8
  $region1: #{forward.1} parent=0
    #allocation2 [shape = 'u8[90112]{0}', space=vmem, size = 0x16000, scoped, tag = 'input window, operand 0, single buffered']
    #allocation3 [shape = 's32[1]{0}', space=sflag, size = 0x4, scoped, tag = 'scoped memory for forward.1']
    %12 = vsyncpa [#allocation3], 0
    // Predicated region
    $region2: #{forward.1} parent=1 // pred_check
      _
    $region3: #{forward.1} parent=1 // pred_check_branch
      %14 = sbr.rel (0) target = $region5
    $region4: #{forward.1} parent=1 // pred_region
      %s16 = ssub.s32 2816, 2816
      %17 = vsyncadd [#allocation3], %s16
      %s18 = sshll.u32 [#allocation2], 4
      %s19 = int_to_ptr.vmem [resolvable:$true] %s18
      %24 = dma.hbm_to_vmem [thread:$0]  %s0, 2816, %s19, [#allocation3], 1408, 1408, 88
    $region5: #{forward.1} parent=1 // pred_fallthru
      _
    // Predicated region
    $region6: #{forward.1} parent=1 // pred_check
      _
    $region7: #{forward.1} parent=1 // pred_check_branch
      %26 = sbr.rel (0) target = $region9
    $region8: #{forward.1} parent=1 // pred_region
      _
    $region9: #{forward.1} parent=1 // pred_fallthru
      _
    // Predicated region
    $region10: #{forward.1} parent=1 // pred_check
      _
    $region11: #{forward.1} parent=1 // pred_check_branch
      %28 = sbr.rel (0) target = $region13
    $region12: #{forward.1} parent=1 // pred_region
      _
    $region13: #{forward.1} parent=1 // pred_fallthru
      _
    // Predicated region
    $region14: #{forward.1} parent=1 // pred_check
      _
    $region15: #{forward.1} parent=1 // pred_check_branch
      %30 = sbr.rel (0) target = $region17
    $region16: #{forward.1} parent=1 // pred_region
      _
    $region17: #{forward.1} parent=1 // pred_fallthru
      _
    // Predicated region
    $region18: #{forward.1} parent=1 // pred_check
      _
    $region19: #{forward.1} parent=1 // pred_check_branch
      %32 = sbr.rel (0) target = $region21
    $region20: #{forward.1} parent=1 // pred_region
      _
    $region21: #{forward.1} parent=1 // pred_fallthru
      _
    // Predicated region
    $region22: #{forward.1} parent=1 // pred_check
      _
    $region23: #{forward.1} parent=1 // pred_check_branch
      %34 = sbr.rel (0) target = $region25
    $region24: #{forward.1} parent=1 // pred_region
      %35 = dma.done [#allocation3], 2816
    $region25: #{forward.1} parent=1 // pred_fallthru
      _
    %p36 = scmp.eq.s32.totalorder 0, 0
    // Predicated region
    $region26: #{forward.1} parent=1 // pred_check
      %p37 = pneg %p36
    $region27: #{forward.1} parent=1 // pred_check_branch
      %39 = sbr.rel (%p37) target = $region29
    $region28: #{forward.1} parent=1 // pred_region
      %vm40 = vcmask 1024
      %41 = vst.msk [vmem:[%s5] sm:$0x3] %vm40, 0.0
    $region29: #{forward.1} parent=1 // pred_fallthru
      _
    %v42 = vld [vmem:[%s1] sm:$0xff]
    %v43 = vld [vmem:[%s1 + $0x8] sm:$0xff]
    %v44 = vld [vmem:[%s1 + $0x10] sm:$0x3f]
    %v45 = vld [vmem:[%s2] sm:$0xff]
    %v46 = vld [vmem:[%s2 + $0x8] sm:$0xff]
    %v47 = vld [vmem:[%s2 + $0x10] sm:$0x3f]
    %s48 = smul.u32 0, 11
    %s49 = smul.addr %s48, 8
    %s50 = scalar_lea.vmem [#allocation2], %s49
    %v51 = vld [vmem:[%s50] sm:$0xff]
    %v52 = vld [vmem:[%s50 + $0x8] sm:$0xff]
    %v53 = vld [vmem:[%s50 + $0x10] sm:$0xff]
    %v54 = vld [vmem:[%s50 + $0x18] sm:$0xff]
    %v55 = vld [vmem:[%s50 + $0x20] sm:$0xff]
    %v56 = vld [vmem:[%s50 + $0x28] sm:$0xff]
    %v57 = vld [vmem:[%s50 + $0x30] sm:$0xff]
    %v58 = vld [vmem:[%s50 + $0x38] sm:$0xff]
    %v59 = vld [vmem:[%s50 + $0x40] sm:$0xff]
    %v60 = vld [vmem:[%s50 + $0x48] sm:$0xff]
    %v61 = vld [vmem:[%s50 + $0x50] sm:$0xff]
    %v62 = vld [vmem:[%s50 + $0x58] sm:$0xff]
    %v63 = vld [vmem:[%s50 + $0x60] sm:$0xff]
    %v64 = vld [vmem:[%s50 + $0x68] sm:$0xff]
    %v65 = vld [vmem:[%s50 + $0x70] sm:$0xff]
    %v66 = vld [vmem:[%s50 + $0x78] sm:$0xff]
    %v67 = vld [vmem:[%s50 + $0x80] sm:$0xff]
    %v68 = vld [vmem:[%s50 + $0x88] sm:$0xff]
    %v69 = vld [vmem:[%s50 + $0x90] sm:$0xff]
    %v70 = vld [vmem:[%s50 + $0x98] sm:$0xff]
    %v71 = vld [vmem:[%s50 + $0xa0] sm:$0xff]
    %v72 = vld [vmem:[%s50 + $0xa8] sm:$0xff]
    %v73 = vadd.f32 %v51, 1e-05
    %v74 = vadd.f32 %v52, 1e-05
    %v75 = vadd.f32 %v53, 1e-05
    %v76 = vadd.f32 %v54, 1e-05
    %v77 = vadd.f32 %v55, 1e-05
    %v78 = vadd.f32 %v56, 1e-05
    %v79 = vadd.f32 %v57, 1e-05
    %v80 = vadd.f32 %v58, 1e-05
    %v81 = vadd.f32 %v59, 1e-05
    %v82 = vadd.f32 %v60, 1e-05
    %v83 = vadd.f32 %v61, 1e-05
    %v84 = vadd.f32 %v62, 1e-05
    %v85 = vadd.f32 %v63, 1e-05
    %v86 = vadd.f32 %v64, 1e-05
    %v87 = vadd.f32 %v65, 1e-05
    %v88 = vadd.f32 %v66, 1e-05
    %v89 = vadd.f32 %v67, 1e-05
    %v90 = vadd.f32 %v68, 1e-05
    %v91 = vadd.f32 %v69, 1e-05
    %v92 = vadd.f32 %v70, 1e-05
    %v93 = vadd.f32 %v71, 1e-05
    %v94 = vadd.f32 %v72, 1e-05
    %v95 = vlog2.pop %v73
    %v96 = vmul.f32 %v95, 0.6931472
    %v97 = vlog2.pop %v74
    %v98 = vmul.f32 %v97, 0.6931472
    %v99 = vlog2.pop %v75
    %v100 = vmul.f32 %v99, 0.6931472
    %v101 = vlog2.pop %v76
    %v102 = vmul.f32 %v101, 0.6931472
    %v103 = vlog2.pop %v77
    %v104 = vmul.f32 %v103, 0.6931472
    %v105 = vlog2.pop %v78
    %v106 = vmul.f32 %v105, 0.6931472
    %v107 = vlog2.pop %v79
    %v108 = vmul.f32 %v107, 0.6931472
    %v109 = vlog2.pop %v80
    %v110 = vmul.f32 %v109, 0.6931472
    %v111 = vlog2.pop %v81
    %v112 = vmul.f32 %v111, 0.6931472
    %v113 = vlog2.pop %v82
    %v114 = vmul.f32 %v113, 0.6931472
    %v115 = vlog2.pop %v83
    %v116 = vmul.f32 %v115, 0.6931472
    %v117 = vlog2.pop %v84
    %v118 = vmul.f32 %v117, 0.6931472
    %v119 = vlog2.pop %v85
    %v120 = vmul.f32 %v119, 0.6931472
    %v121 = vlog2.pop %v86
    %v122 = vmul.f32 %v121, 0.6931472
    %v123 = vlog2.pop %v87
    %v124 = vmul.f32 %v123, 0.6931472
    %v125 = vlog2.pop %v88
    %v126 = vmul.f32 %v125, 0.6931472
    %v127 = vlog2.pop %v89
    %v128 = vmul.f32 %v127, 0.6931472
    %v129 = vlog2.pop %v90
    %v130 = vmul.f32 %v129, 0.6931472
    %v131 = vlog2.pop %v91
    %v132 = vmul.f32 %v131, 0.6931472
    %v133 = vlog2.pop %v92
    %v134 = vmul.f32 %v133, 0.6931472
    %v135 = vlog2.pop %v93
    %v136 = vmul.f32 %v135, 0.6931472
    %v137 = vlog2.pop %v94
    %v138 = vmul.f32 %v137, 0.6931472
    %v139 = vrot.slane %v96, 4
    %v140 = vadd.f32 %v96, %v139
    %v141 = vrot.slane %v140, 2
    %v142 = vadd.f32 %v140, %v141
    %v143 = vrot.slane %v142, 1
    %v144 = vadd.f32 %v142, %v143
    %v145 = vrot.slane %v98, 4
    %v146 = vadd.f32 %v98, %v145
    %v147 = vrot.slane %v146, 2
    %v148 = vadd.f32 %v146, %v147
    %v149 = vrot.slane %v148, 1
    %v150 = vadd.f32 %v148, %v149
    %v151 = vrot.slane %v100, 4
    %v152 = vadd.f32 %v100, %v151
    %v153 = vrot.slane %v152, 2
    %v154 = vadd.f32 %v152, %v153
    %v155 = vrot.slane %v154, 1
    %v156 = vadd.f32 %v154, %v155
    %v157 = vrot.slane %v102, 4
    %v158 = vadd.f32 %v102, %v157
    %v159 = vrot.slane %v158, 2
    %v160 = vadd.f32 %v158, %v159
    %v161 = vrot.slane %v160, 1
    %v162 = vadd.f32 %v160, %v161
    %v163 = vrot.slane %v104, 4
    %v164 = vadd.f32 %v104, %v163
    %v165 = vrot.slane %v164, 2
    %v166 = vadd.f32 %v164, %v165
    %v167 = vrot.slane %v166, 1
    %v168 = vadd.f32 %v166, %v167
    %v169 = vrot.slane %v106, 4
    %v170 = vadd.f32 %v106, %v169
    %v171 = vrot.slane %v170, 2
    %v172 = vadd.f32 %v170, %v171
    %v173 = vrot.slane %v172, 1
    %v174 = vadd.f32 %v172, %v173
    %v175 = vrot.slane %v108, 4
    %v176 = vadd.f32 %v108, %v175
    %v177 = vrot.slane %v176, 2
    %v178 = vadd.f32 %v176, %v177
    %v179 = vrot.slane %v178, 1
    %v180 = vadd.f32 %v178, %v179
    %v181 = vrot.slane %v110, 4
    %v182 = vadd.f32 %v110, %v181
    %v183 = vrot.slane %v182, 2
    %v184 = vadd.f32 %v182, %v183
    %v185 = vrot.slane %v184, 1
    %v186 = vadd.f32 %v184, %v185
    %v187 = vrot.slane %v112, 4
    %v188 = vadd.f32 %v112, %v187
    %v189 = vrot.slane %v188, 2
    %v190 = vadd.f32 %v188, %v189
    %v191 = vrot.slane %v190, 1
    %v192 = vadd.f32 %v190, %v191
    %v193 = vrot.slane %v114, 4
    %v194 = vadd.f32 %v114, %v193
    %v195 = vrot.slane %v194, 2
    %v196 = vadd.f32 %v194, %v195
    %v197 = vrot.slane %v196, 1
    %v198 = vadd.f32 %v196, %v197
    %vm199 = vcmask 351232
    %v200 = vsel %vm199, %v116, 0.0
    %v201 = vrot.slane %v200, 4
    %v202 = vadd.f32 %v200, %v201
    %v203 = vrot.slane %v202, 2
    %v204 = vadd.f32 %v202, %v203
    %v205 = vrot.slane %v204, 1
    %v206 = vadd.f32 %v204, %v205
    %v207 = vrot.slane %v118, 4
    %v208 = vadd.f32 %v118, %v207
    %v209 = vrot.slane %v208, 2
    %v210 = vadd.f32 %v208, %v209
    %v211 = vrot.slane %v210, 1
    %v212 = vadd.f32 %v210, %v211
    %v213 = vrot.slane %v120, 4
    %v214 = vadd.f32 %v120, %v213
    %v215 = vrot.slane %v214, 2
    %v216 = vadd.f32 %v214, %v215
    %v217 = vrot.slane %v216, 1
    %v218 = vadd.f32 %v216, %v217
    %v219 = vrot.slane %v122, 4
    %v220 = vadd.f32 %v122, %v219
    %v221 = vrot.slane %v220, 2
    %v222 = vadd.f32 %v220, %v221
    %v223 = vrot.slane %v222, 1
    %v224 = vadd.f32 %v222, %v223
    %v225 = vrot.slane %v124, 4
    %v226 = vadd.f32 %v124, %v225
    %v227 = vrot.slane %v226, 2
    %v228 = vadd.f32 %v226, %v227
    %v229 = vrot.slane %v228, 1
    %v230 = vadd.f32 %v228, %v229
    %v231 = vrot.slane %v126, 4
    %v232 = vadd.f32 %v126, %v231
    %v233 = vrot.slane %v232, 2
    %v234 = vadd.f32 %v232, %v233
    %v235 = vrot.slane %v234, 1
    %v236 = vadd.f32 %v234, %v235
    %v237 = vrot.slane %v128, 4
    %v238 = vadd.f32 %v128, %v237
    %v239 = vrot.slane %v238, 2
    %v240 = vadd.f32 %v238, %v239
    %v241 = vrot.slane %v240, 1
    %v242 = vadd.f32 %v240, %v241
    %v243 = vrot.slane %v130, 4
    %v244 = vadd.f32 %v130, %v243
    %v245 = vrot.slane %v244, 2
    %v246 = vadd.f32 %v244, %v245
    %v247 = vrot.slane %v246, 1
    %v248 = vadd.f32 %v246, %v247
    %v249 = vrot.slane %v132, 4
    %v250 = vadd.f32 %v132, %v249
    %v251 = vrot.slane %v250, 2
    %v252 = vadd.f32 %v250, %v251
    %v253 = vrot.slane %v252, 1
    %v254 = vadd.f32 %v252, %v253
    %v255 = vrot.slane %v134, 4
    %v256 = vadd.f32 %v134, %v255
    %v257 = vrot.slane %v256, 2
    %v258 = vadd.f32 %v256, %v257
    %v259 = vrot.slane %v258, 1
    %v260 = vadd.f32 %v258, %v259
    %v261 = vrot.slane %v136, 4
    %v262 = vadd.f32 %v136, %v261
    %v263 = vrot.slane %v262, 2
    %v264 = vadd.f32 %v262, %v263
    %v265 = vrot.slane %v264, 1
    %v266 = vadd.f32 %v264, %v265
    %v267 = vsel %vm199, %v138, 0.0
    %v268 = vrot.slane %v267, 4
    %v269 = vadd.f32 %v267, %v268
    %v270 = vrot.slane %v269, 2
    %v271 = vadd.f32 %v269, %v270
    %v272 = vrot.slane %v271, 1
    %v273 = vadd.f32 %v271, %v272
    %v274 = vadd.f32 %v144, 0.0
    %v275 = vadd.f32 %v150, 0.0
    %v276 = vadd.f32 %v156, 0.0
    %v277 = vadd.f32 %v162, 0.0
    %v278 = vadd.f32 %v168, 0.0
    %v279 = vadd.f32 %v174, 0.0
    %v280 = vadd.f32 %v180, 0.0
    %v281 = vadd.f32 %v186, 0.0
    %v282 = vadd.f32 %v192, 0.0
    %v283 = vadd.f32 %v198, 0.0
    %v284 = vadd.f32 %v206, 0.0
    %v285 = vadd.f32 %v212, 0.0
    %v286 = vadd.f32 %v218, 0.0
    %v287 = vadd.f32 %v224, 0.0
    %v288 = vadd.f32 %v230, 0.0
    %v289 = vadd.f32 %v236, 0.0
    %v290 = vadd.f32 %v242, 0.0
    %v291 = vadd.f32 %v248, 0.0
    %v292 = vadd.f32 %v254, 0.0
    %v293 = vadd.f32 %v260, 0.0
    %v294 = vadd.f32 %v266, 0.0
    %v295 = vadd.f32 %v273, 0.0
    %v296 = vrot.slane %v73, 4
    %v297 = vadd.f32 %v73, %v296
    %v298 = vrot.slane %v297, 2
    %v299 = vadd.f32 %v297, %v298
    %v300 = vrot.slane %v299, 1
    %v301 = vadd.f32 %v299, %v300
    %v302 = vrot.slane %v74, 4
    %v303 = vadd.f32 %v74, %v302
    %v304 = vrot.slane %v303, 2
    %v305 = vadd.f32 %v303, %v304
    %v306 = vrot.slane %v305, 1
    %v307 = vadd.f32 %v305, %v306
    %v308 = vrot.slane %v75, 4
    %v309 = vadd.f32 %v75, %v308
    %v310 = vrot.slane %v309, 2
    %v311 = vadd.f32 %v309, %v310
    %v312 = vrot.slane %v311, 1
    %v313 = vadd.f32 %v311, %v312
    %v314 = vrot.slane %v76, 4
    %v315 = vadd.f32 %v76, %v314
    %v316 = vrot.slane %v315, 2
    %v317 = vadd.f32 %v315, %v316
    %v318 = vrot.slane %v317, 1
    %v319 = vadd.f32 %v317, %v318
    %v320 = vrot.slane %v77, 4
    %v321 = vadd.f32 %v77, %v320
    %v322 = vrot.slane %v321, 2
    %v323 = vadd.f32 %v321, %v322
    %v324 = vrot.slane %v323, 1
    %v325 = vadd.f32 %v323, %v324
    %v326 = vrot.slane %v78, 4
    %v327 = vadd.f32 %v78, %v326
    %v328 = vrot.slane %v327, 2
    %v329 = vadd.f32 %v327, %v328
    %v330 = vrot.slane %v329, 1
    %v331 = vadd.f32 %v329, %v330
    %v332 = vrot.slane %v79, 4
    %v333 = vadd.f32 %v79, %v332
    %v334 = vrot.slane %v333, 2
    %v335 = vadd.f32 %v333, %v334
    %v336 = vrot.slane %v335, 1
    %v337 = vadd.f32 %v335, %v336
    %v338 = vrot.slane %v80, 4
    %v339 = vadd.f32 %v80, %v338
    %v340 = vrot.slane %v339, 2
    %v341 = vadd.f32 %v339, %v340
    %v342 = vrot.slane %v341, 1
    %v343 = vadd.f32 %v341, %v342
    %v344 = vrot.slane %v81, 4
    %v345 = vadd.f32 %v81, %v344
    %v346 = vrot.slane %v345, 2
    %v347 = vadd.f32 %v345, %v346
    %v348 = vrot.slane %v347, 1
    %v349 = vadd.f32 %v347, %v348
    %v350 = vrot.slane %v82, 4
    %v351 = vadd.f32 %v82, %v350
    %v352 = vrot.slane %v351, 2
    %v353 = vadd.f32 %v351, %v352
    %v354 = vrot.slane %v353, 1
    %v355 = vadd.f32 %v353, %v354
    %v356 = vsel %vm199, %v83, 0.0
    %v357 = vrot.slane %v356, 4
    %v358 = vadd.f32 %v356, %v357
    %v359 = vrot.slane %v358, 2
    %v360 = vadd.f32 %v358, %v359
    %v361 = vrot.slane %v360, 1
    %v362 = vadd.f32 %v360, %v361
    %v363 = vrot.slane %v84, 4
    %v364 = vadd.f32 %v84, %v363
    %v365 = vrot.slane %v364, 2
    %v366 = vadd.f32 %v364, %v365
    %v367 = vrot.slane %v366, 1
    %v368 = vadd.f32 %v366, %v367
    %v369 = vrot.slane %v85, 4
    %v370 = vadd.f32 %v85, %v369
    %v371 = vrot.slane %v370, 2
    %v372 = vadd.f32 %v370, %v371
    %v373 = vrot.slane %v372, 1
    %v374 = vadd.f32 %v372, %v373
    %v375 = vrot.slane %v86, 4
    %v376 = vadd.f32 %v86, %v375
    %v377 = vrot.slane %v376, 2
    %v378 = vadd.f32 %v376, %v377
    %v379 = vrot.slane %v378, 1
    %v380 = vadd.f32 %v378, %v379
    %v381 = vrot.slane %v87, 4
    %v382 = vadd.f32 %v87, %v381
    %v383 = vrot.slane %v382, 2
    %v384 = vadd.f32 %v382, %v383
    %v385 = vrot.slane %v384, 1
    %v386 = vadd.f32 %v384, %v385
    %v387 = vrot.slane %v88, 4
    %v388 = vadd.f32 %v88, %v387
    %v389 = vrot.slane %v388, 2
    %v390 = vadd.f32 %v388, %v389
    %v391 = vrot.slane %v390, 1
    %v392 = vadd.f32 %v390, %v391
    %v393 = vrot.slane %v89, 4
    %v394 = vadd.f32 %v89, %v393
    %v395 = vrot.slane %v394, 2
    %v396 = vadd.f32 %v394, %v395
    %v397 = vrot.slane %v396, 1
    %v398 = vadd.f32 %v396, %v397
    %v399 = vrot.slane %v90, 4
    %v400 = vadd.f32 %v90, %v399
    %v401 = vrot.slane %v400, 2
    %v402 = vadd.f32 %v400, %v401
    %v403 = vrot.slane %v402, 1
    %v404 = vadd.f32 %v402, %v403
    %v405 = vrot.slane %v91, 4
    %v406 = vadd.f32 %v91, %v405
    %v407 = vrot.slane %v406, 2
    %v408 = vadd.f32 %v406, %v407
    %v409 = vrot.slane %v408, 1
    %v410 = vadd.f32 %v408, %v409
    %v411 = vrot.slane %v92, 4
    %v412 = vadd.f32 %v92, %v411
    %v413 = vrot.slane %v412, 2
    %v414 = vadd.f32 %v412, %v413
    %v415 = vrot.slane %v414, 1
    %v416 = vadd.f32 %v414, %v415
    %v417 = vrot.slane %v93, 4
    %v418 = vadd.f32 %v93, %v417
    %v419 = vrot.slane %v418, 2
    %v420 = vadd.f32 %v418, %v419
    %v421 = vrot.slane %v420, 1
    %v422 = vadd.f32 %v420, %v421
    %v423 = vsel %vm199, %v94, 0.0
    %v424 = vrot.slane %v423, 4
    %v425 = vadd.f32 %v423, %v424
    %v426 = vrot.slane %v425, 2
    %v427 = vadd.f32 %v425, %v426
    %v428 = vrot.slane %v427, 1
    %v429 = vadd.f32 %v427, %v428
    %v430 = vadd.f32 %v301, 0.0
    %v431 = vadd.f32 %v307, 0.0
    %v432 = vadd.f32 %v313, 0.0
    %v433 = vadd.f32 %v319, 0.0
    %v434 = vadd.f32 %v325, 0.0
    %v435 = vadd.f32 %v331, 0.0
    %v436 = vadd.f32 %v337, 0.0
    %v437 = vadd.f32 %v343, 0.0
    %v438 = vadd.f32 %v349, 0.0
    %v439 = vadd.f32 %v355, 0.0
    %v440 = vadd.f32 %v362, 0.0
    %v441 = vadd.f32 %v368, 0.0
    %v442 = vadd.f32 %v374, 0.0
    %v443 = vadd.f32 %v380, 0.0
    %v444 = vadd.f32 %v386, 0.0
    %v445 = vadd.f32 %v392, 0.0
    %v446 = vadd.f32 %v398, 0.0
    %v447 = vadd.f32 %v404, 0.0
    %v448 = vadd.f32 %v410, 0.0
    %v449 = vadd.f32 %v416, 0.0
    %v450 = vadd.f32 %v422, 0.0
    %v451 = vadd.f32 %v429, 0.0
    %v474 = vcombine.low %v274, %v275
    %v475 = vcombine.low %v276, %v277
    %v477 = vunpack.c.l.s4 1983009808
    %v478 = vunpack.c.0.s8 %v477
    %v479 = vlaneseq
    %v480 = vshrl.u32 %v479, 7
    %v481 = vsub.s32 %v478, %v480
    %v482 = vrot.slane %v474, %v481
    %v484 = vunpack.c.l.s4 1983009808
    %v485 = vunpack.c.0.s8 %v484
    %v486 = vlaneseq
    %v487 = vshrl.u32 %v486, 7
    %v488 = vsub.s32 %v485, %v487
    %v489 = vrot.slane %v475, %v488
    %v490 = vcombine.low %v482, %v489
    %v491 = vcombine.low %v278, %v279
    %v492 = vcombine.low %v280, %v281
    %v494 = vunpack.c.l.s4 1983009808
    %v495 = vunpack.c.0.s8 %v494
    %v496 = vlaneseq
    %v497 = vshrl.u32 %v496, 7
    %v498 = vsub.s32 %v495, %v497
    %v499 = vrot.slane %v491, %v498
    %v501 = vunpack.c.l.s4 1983009808
    %v502 = vunpack.c.0.s8 %v501
    %v503 = vlaneseq
    %v504 = vshrl.u32 %v503, 7
    %v505 = vsub.s32 %v502, %v504
    %v506 = vrot.slane %v492, %v505
    %v507 = vcombine.low %v499, %v506
    %v508 = vcombine.low %v282, %v283
    %v510 = vunpack.c.l.s4 1983009808
    %v511 = vunpack.c.0.s8 %v510
    %v512 = vlaneseq
    %v513 = vshrl.u32 %v512, 7
    %v514 = vsub.s32 %v511, %v513
    %v515 = vrot.slane %v508, %v514
    %v517 = vunpack.c.l.s4 1983009808
    %v518 = vunpack.c.0.s8 %v517
    %v519 = vlaneseq
    %v520 = vshrl.u32 %v519, 7
    %v521 = vsub.s32 %v518, %v520
    %v522 = vrot.slane %v284, %v521
    %v523 = vcombine.low %v515, %v522
    %v524 = vcombine.low %v285, %v286
    %v525 = vcombine.low %v287, %v288
    %v527 = vunpack.c.l.s4 1983009808
    %v528 = vunpack.c.0.s8 %v527
    %v529 = vlaneseq
    %v530 = vshrl.u32 %v529, 7
    %v531 = vsub.s32 %v528, %v530
    %v532 = vrot.slane %v524, %v531
    %v534 = vunpack.c.l.s4 1983009808
    %v535 = vunpack.c.0.s8 %v534
    %v536 = vlaneseq
    %v537 = vshrl.u32 %v536, 7
    %v538 = vsub.s32 %v535, %v537
    %v539 = vrot.slane %v525, %v538
    %v540 = vcombine.low %v532, %v539
    %v541 = vcombine.low %v289, %v290
    %v542 = vcombine.low %v291, %v292
    %v544 = vunpack.c.l.s4 1983009808
    %v545 = vunpack.c.0.s8 %v544
    %v546 = vlaneseq
    %v547 = vshrl.u32 %v546, 7
    %v548 = vsub.s32 %v545, %v547
    %v549 = vrot.slane %v541, %v548
    %v551 = vunpack.c.l.s4 1983009808
    %v552 = vunpack.c.0.s8 %v551
    %v553 = vlaneseq
    %v554 = vshrl.u32 %v553, 7
    %v555 = vsub.s32 %v552, %v554
    %v556 = vrot.slane %v542, %v555
    %v557 = vcombine.low %v549, %v556
    %v558 = vcombine.low %v293, %v294
    %v560 = vunpack.c.l.s4 1983009808
    %v561 = vunpack.c.0.s8 %v560
    %v562 = vlaneseq
    %v563 = vshrl.u32 %v562, 7
    %v564 = vsub.s32 %v561, %v563
    %v565 = vrot.slane %v558, %v564
    %v567 = vunpack.c.l.s4 1983009808
    %v568 = vunpack.c.0.s8 %v567
    %v569 = vlaneseq
    %v570 = vshrl.u32 %v569, 7
    %v571 = vsub.s32 %v568, %v570
    %v572 = vrot.slane %v295, %v571
    %v573 = vcombine.low %v565, %v572
    %vm574 = vcmask 1044484
    %v575 = vsel %vm574, %v490, %v490
    %vm576 = vcmask 1046534
    %v577 = vsel %vm576, %v490, %v575
    %v578 = vrot.slane %v540, 7
    %vm579 = vcmask 1041409
    %v580 = vsel %vm579, %v578, %v577
    %vm581 = vcmask 1043459
    %v582 = vsel %vm581, %v578, %v580
    %vm583 = vcmask 1045509
    %v584 = vsel %vm583, %v578, %v582
    %vm585 = vcmask 1047559
    %v586 = vsel %vm585, %v578, %v584
    %v587 = vsel %vm574, %v507, %v507
    %v588 = vsel %vm576, %v507, %v587
    %v589 = vrot.slane %v557, 7
    %v590 = vsel %vm579, %v589, %v588
    %v591 = vsel %vm581, %v589, %v590
    %v592 = vsel %vm583, %v589, %v591
    %v593 = vsel %vm585, %v589, %v592
    %v594 = vsel %vm574, %v523, %v523
    %v595 = vsel %vm576, %v523, %v594
    %v596 = vrot.slane %v573, 7
    %v597 = vsel %vm579, %v596, %v595
    %v598 = vsel %vm581, %v596, %v597
    %v599 = vsel %vm583, %v596, %v598
    %v600 = vsel %vm585, %v596, %v599
    %v604 = vmul.f32 %v42, %v586
    %v605 = vmul.f32 %v43, %v593
    %v606 = vmul.f32 %v44, %v600
    %v629 = vcombine.low %v430, %v431
    %v630 = vcombine.low %v432, %v433
    %v632 = vunpack.c.l.s4 1983009808
    %v633 = vunpack.c.0.s8 %v632
    %v634 = vlaneseq
    %v635 = vshrl.u32 %v634, 7
    %v636 = vsub.s32 %v633, %v635
    %v637 = vrot.slane %v629, %v636
    %v639 = vunpack.c.l.s4 1983009808
    %v640 = vunpack.c.0.s8 %v639
    %v641 = vlaneseq
    %v642 = vshrl.u32 %v641, 7
    %v643 = vsub.s32 %v640, %v642
    %v644 = vrot.slane %v630, %v643
    %v645 = vcombine.low %v637, %v644
    %v646 = vcombine.low %v434, %v435
    %v647 = vcombine.low %v436, %v437
    %v649 = vunpack.c.l.s4 1983009808
    %v650 = vunpack.c.0.s8 %v649
    %v651 = vlaneseq
    %v652 = vshrl.u32 %v651, 7
    %v653 = vsub.s32 %v650, %v652
    %v654 = vrot.slane %v646, %v653
    %v656 = vunpack.c.l.s4 1983009808
    %v657 = vunpack.c.0.s8 %v656
    %v658 = vlaneseq
    %v659 = vshrl.u32 %v658, 7
    %v660 = vsub.s32 %v657, %v659
    %v661 = vrot.slane %v647, %v660
    %v662 = vcombine.low %v654, %v661
    %v663 = vcombine.low %v438, %v439
    %v665 = vunpack.c.l.s4 1983009808
    %v666 = vunpack.c.0.s8 %v665
    %v667 = vlaneseq
    %v668 = vshrl.u32 %v667, 7
    %v669 = vsub.s32 %v666, %v668
    %v670 = vrot.slane %v663, %v669
    %v672 = vunpack.c.l.s4 1983009808
    %v673 = vunpack.c.0.s8 %v672
    %v674 = vlaneseq
    %v675 = vshrl.u32 %v674, 7
    %v676 = vsub.s32 %v673, %v675
    %v677 = vrot.slane %v440, %v676
    %v678 = vcombine.low %v670, %v677
    %v679 = vcombine.low %v441, %v442
    %v680 = vcombine.low %v443, %v444
    %v682 = vunpack.c.l.s4 1983009808
    %v683 = vunpack.c.0.s8 %v682
    %v684 = vlaneseq
    %v685 = vshrl.u32 %v684, 7
    %v686 = vsub.s32 %v683, %v685
    %v687 = vrot.slane %v679, %v686
    %v689 = vunpack.c.l.s4 1983009808
    %v690 = vunpack.c.0.s8 %v689
    %v691 = vlaneseq
    %v692 = vshrl.u32 %v691, 7
    %v693 = vsub.s32 %v690, %v692
    %v694 = vrot.slane %v680, %v693
    %v695 = vcombine.low %v687, %v694
    %v696 = vcombine.low %v445, %v446
    %v697 = vcombine.low %v447, %v448
    %v699 = vunpack.c.l.s4 1983009808
    %v700 = vunpack.c.0.s8 %v699
    %v701 = vlaneseq
    %v702 = vshrl.u32 %v701, 7
    %v703 = vsub.s32 %v700, %v702
    %v704 = vrot.slane %v696, %v703
    %v706 = vunpack.c.l.s4 1983009808
    %v707 = vunpack.c.0.s8 %v706
    %v708 = vlaneseq
    %v709 = vshrl.u32 %v708, 7
    %v710 = vsub.s32 %v707, %v709
    %v711 = vrot.slane %v697, %v710
    %v712 = vcombine.low %v704, %v711
    %v713 = vcombine.low %v449, %v450
    %v715 = vunpack.c.l.s4 1983009808
    %v716 = vunpack.c.0.s8 %v715
    %v717 = vlaneseq
    %v718 = vshrl.u32 %v717, 7
    %v719 = vsub.s32 %v716, %v718
    %v720 = vrot.slane %v713, %v719
    %v722 = vunpack.c.l.s4 1983009808
    %v723 = vunpack.c.0.s8 %v722
    %v724 = vlaneseq
    %v725 = vshrl.u32 %v724, 7
    %v726 = vsub.s32 %v723, %v725
    %v727 = vrot.slane %v451, %v726
    %v728 = vcombine.low %v720, %v727
    %v729 = vsel %vm574, %v645, %v645
    %v730 = vsel %vm576, %v645, %v729
    %v731 = vrot.slane %v695, 7
    %v732 = vsel %vm579, %v731, %v730
    %v733 = vsel %vm581, %v731, %v732
    %v734 = vsel %vm583, %v731, %v733
    %v735 = vsel %vm585, %v731, %v734
    %v736 = vsel %vm574, %v662, %v662
    %v737 = vsel %vm576, %v662, %v736
    %v738 = vrot.slane %v712, 7
    %v739 = vsel %vm579, %v738, %v737
    %v740 = vsel %vm581, %v738, %v739
    %v741 = vsel %vm583, %v738, %v740
    %v742 = vsel %vm585, %v738, %v741
    %v743 = vsel %vm574, %v678, %v678
    %v744 = vsel %vm576, %v678, %v743
    %v745 = vrot.slane %v728, 7
    %v746 = vsel %vm579, %v745, %v744
    %v747 = vsel %vm581, %v745, %v746
    %v748 = vsel %vm583, %v745, %v747
    %v749 = vsel %vm585, %v745, %v748
    %v753 = vmul.f32 %v45, %v735
    %v754 = vmul.f32 %v46, %v742
    %v755 = vmul.f32 %v47, %v749
    %v756 = vsub.f32 %v604, %v753
    %v757 = vsub.f32 %v605, %v754
    %v758 = vsub.f32 %v606, %v755
    %v759 = vld [vmem:[%s5] sm:$0x3]
    %v763 = vcombine.high %v756, %v756
    %v765 = vunpack.c.l.s4 1983009808
    %v766 = vunpack.c.0.s8 %v765
    %v767 = vlaneseq
    %v768 = vshrl.u32 %v767, 7
    %v769 = vsub.s32 %v766, %v768
    %v770 = vrot.slane %v756, %v769
    %v772 = vunpack.c.l.s4 1983009808
    %v773 = vunpack.c.0.s8 %v772
    %v774 = vlaneseq
    %v775 = vshrl.u32 %v774, 7
    %v776 = vsub.s32 %v773, %v775
    %v777 = vrot.slane %v763, %v776
    %v778 = vcombine.high %v770, %v770
    %v779 = vcombine.high %v777, %v777
    %v780 = vcombine.high %v757, %v757
    %v782 = vunpack.c.l.s4 1983009808
    %v783 = vunpack.c.0.s8 %v782
    %v784 = vlaneseq
    %v785 = vshrl.u32 %v784, 7
    %v786 = vsub.s32 %v783, %v785
    %v787 = vrot.slane %v757, %v786
    %v789 = vunpack.c.l.s4 1983009808
    %v790 = vunpack.c.0.s8 %v789
    %v791 = vlaneseq
    %v792 = vshrl.u32 %v791, 7
    %v793 = vsub.s32 %v790, %v792
    %v794 = vrot.slane %v780, %v793
    %v795 = vcombine.high %v787, %v787
    %v796 = vcombine.high %v794, %v794
    %v797 = vcombine.high %v758, %v758
    %v799 = vunpack.c.l.s4 1983009808
    %v800 = vunpack.c.0.s8 %v799
    %v801 = vlaneseq
    %v802 = vshrl.u32 %v801, 7
    %v803 = vsub.s32 %v800, %v802
    %v804 = vrot.slane %v758, %v803
    %v806 = vunpack.c.l.s4 1983009808
    %v807 = vunpack.c.0.s8 %v806
    %v808 = vlaneseq
    %v809 = vshrl.u32 %v808, 7
    %v810 = vsub.s32 %v807, %v809
    %v811 = vrot.slane %v797, %v810
    %v812 = vcombine.high %v804, %v804
    %vm824 = vcmask 1041408
    %v825 = vsel %vm824, %v770, 0.0
    %v826 = vsel %vm824, %v778, 0.0
    %v827 = vadd.f32 %v825, %v826
    %v828 = vsel %vm824, %v777, 0.0
    %v829 = vadd.f32 %v827, %v828
    %v830 = vsel %vm824, %v779, 0.0
    %v831 = vadd.f32 %v829, %v830
    %v832 = vsel %vm824, %v787, 0.0
    %v833 = vadd.f32 %v831, %v832
    %v834 = vsel %vm824, %v795, 0.0
    %v835 = vadd.f32 %v833, %v834
    %v836 = vsel %vm824, %v794, 0.0
    %v837 = vadd.f32 %v835, %v836
    %v838 = vsel %vm824, %v796, 0.0
    %v839 = vadd.f32 %v837, %v838
    %v840 = vsel %vm824, %v804, 0.0
    %v841 = vadd.f32 %v839, %v840
    %v842 = vsel %vm824, %v812, 0.0
    %v843 = vadd.f32 %v841, %v842
    %vm844 = vcmask 345088
    %v845 = vsel %vm844, %v811, 0.0
    %v846 = vadd.f32 %v843, %v845
    %847 = vadd.xlane.f32.xlu0 %v846
    %v848 = vpop.xlane.xlu0 %847
    %v849 = vadd.f32 %v759, %v848
    %vm850 = vcmask 1024
    %851 = vst.msk [vmem:[%s5] sm:$0x3] %vm850, %v849
    // Predicated region
    $region30: #{forward.1} parent=1 // pred_check
      %p852 = pneg %p36
    $region31: #{forward.1} parent=1 // pred_check_branch
      %854 = sbr.rel (%p852) target = $region33
    $region32: #{forward.1} parent=1 // pred_region
      %v855 = vld [vmem:[%s3] sm:$0x3]
      %v856 = vld [vmem:[%s5] sm:$0x3]
      %v857 = vmul.f32 %v856, 0.125
      %v858 = vsub.f32 %v855, %v857
      %859 = vst.msk [vmem:[%s5] sm:$0x3] %vm850, %v858
      %v860 = vld [vmem:[%s4] sm:$0xff]
      %v861 = vld [vmem:[%s4 + $0x8] sm:$0xff]
      %v862 = vld [vmem:[%s4 + $0x10] sm:$0x3f]
      %v866 = vcombine.high %v860, %v860
      %v868 = vunpack.c.l.s4 1983009808
      %v869 = vunpack.c.0.s8 %v868
      %v870 = vlaneseq
      %v871 = vshrl.u32 %v870, 7
      %v872 = vsub.s32 %v869, %v871
      %v873 = vrot.slane %v860, %v872
      %v875 = vunpack.c.l.s4 1983009808
      %v876 = vunpack.c.0.s8 %v875
      %v877 = vlaneseq
      %v878 = vshrl.u32 %v877, 7
      %v879 = vsub.s32 %v876, %v878
      %v880 = vrot.slane %v866, %v879
      %v881 = vcombine.high %v873, %v873
      %v882 = vcombine.high %v880, %v880
      %v883 = vcombine.high %v861, %v861
      %v885 = vunpack.c.l.s4 1983009808
      %v886 = vunpack.c.0.s8 %v885
      %v887 = vlaneseq
      %v888 = vshrl.u32 %v887, 7
      %v889 = vsub.s32 %v886, %v888
      %v890 = vrot.slane %v861, %v889
      %v892 = vunpack.c.l.s4 1983009808
      %v893 = vunpack.c.0.s8 %v892
      %v894 = vlaneseq
      %v895 = vshrl.u32 %v894, 7
      %v896 = vsub.s32 %v893, %v895
      %v897 = vrot.slane %v883, %v896
      %v898 = vcombine.high %v890, %v890
      %v899 = vcombine.high %v897, %v897
      %v900 = vcombine.high %v862, %v862
      %v902 = vunpack.c.l.s4 1983009808
      %v903 = vunpack.c.0.s8 %v902
      %v904 = vlaneseq
      %v905 = vshrl.u32 %v904, 7
      %v906 = vsub.s32 %v903, %v905
      %v907 = vrot.slane %v862, %v906
      %v909 = vunpack.c.l.s4 1983009808
      %v910 = vunpack.c.0.s8 %v909
      %v911 = vlaneseq
      %v912 = vshrl.u32 %v911, 7
      %v913 = vsub.s32 %v910, %v912
      %v914 = vrot.slane %v900, %v913
      %v915 = vcombine.high %v907, %v907
      %v927 = vsel %vm824, %v873, 0.0
      %v928 = vsel %vm824, %v881, 0.0
      %v929 = vadd.f32 %v927, %v928
      %v930 = vsel %vm824, %v880, 0.0
      %v931 = vadd.f32 %v929, %v930
      %v932 = vsel %vm824, %v882, 0.0
      %v933 = vadd.f32 %v931, %v932
      %v934 = vsel %vm824, %v890, 0.0
      %v935 = vadd.f32 %v933, %v934
      %v936 = vsel %vm824, %v898, 0.0
      %v937 = vadd.f32 %v935, %v936
      %v938 = vsel %vm824, %v897, 0.0
      %v939 = vadd.f32 %v937, %v938
      %v940 = vsel %vm824, %v899, 0.0
      %v941 = vadd.f32 %v939, %v940
      %v942 = vsel %vm824, %v907, 0.0
      %v943 = vadd.f32 %v941, %v942
      %v944 = vsel %vm824, %v915, 0.0
      %v945 = vadd.f32 %v943, %v944
      %v946 = vsel %vm844, %v914, 0.0
      %v947 = vadd.f32 %v945, %v946
      %948 = vadd.xlane.f32.xlu0 %v947
      %v949 = vpop.xlane.xlu0 %948
      %vm950 = vcmp.lt.f32.partialorder %v949, 8.0
      %v951 = vrcp.pop %v949
      %v952 = vmul.f32 1.0, %v951
      %v953 = vsel %vm950, %v952, 0.0
      %v954 = vadd.f32 %v953, 0.0
      %v955 = vadd.f32 %v949, 1.0
      %v956 = vsel %vm950, %v955, %v949
      %vm957 = vcmp.lt.f32.partialorder %v956, 8.0
      %v958 = vrcp.pop %v956
      %v959 = vmul.f32 1.0, %v958
      %v960 = vsel %vm957, %v959, 0.0
      %v961 = vadd.f32 %v954, %v960
      %v962 = vadd.f32 %v956, 1.0
      %v963 = vsel %vm957, %v962, %v956
      %vm964 = vcmp.lt.f32.partialorder %v963, 8.0
      %v965 = vrcp.pop %v963
      %v966 = vmul.f32 1.0, %v965
      %v967 = vsel %vm964, %v966, 0.0
      %v968 = vadd.f32 %v961, %v967
      %v969 = vadd.f32 %v963, 1.0
      %v970 = vsel %vm964, %v969, %v963
      %vm971 = vcmp.lt.f32.partialorder %v970, 8.0
      %v972 = vrcp.pop %v970
      %v973 = vmul.f32 1.0, %v972
      %v974 = vsel %vm971, %v973, 0.0
      %v975 = vadd.f32 %v968, %v974
      %v976 = vadd.f32 %v970, 1.0
      %v977 = vsel %vm971, %v976, %v970
      %vm978 = vcmp.lt.f32.partialorder %v977, 8.0
      %v979 = vrcp.pop %v977
      %v980 = vmul.f32 1.0, %v979
      %v981 = vsel %vm978, %v980, 0.0
      %v982 = vadd.f32 %v975, %v981
      %v983 = vadd.f32 %v977, 1.0
      %v984 = vsel %vm978, %v983, %v977
      %vm985 = vcmp.lt.f32.partialorder %v984, 8.0
      %v986 = vrcp.pop %v984
      %v987 = vmul.f32 1.0, %v986
      %v988 = vsel %vm985, %v987, 0.0
      %v989 = vadd.f32 %v982, %v988
      %v990 = vadd.f32 %v984, 1.0
      %v991 = vsel %vm985, %v990, %v984
      %vm992 = vcmp.lt.f32.partialorder %v991, 8.0
      %v993 = vrcp.pop %v991
      %v994 = vmul.f32 1.0, %v993
      %v995 = vsel %vm992, %v994, 0.0
      %v996 = vadd.f32 %v989, %v995
      %v997 = vadd.f32 %v991, 1.0
      %v998 = vsel %vm992, %v997, %v991
      %vm999 = vcmp.lt.f32.partialorder %v998, 8.0
      %v1000 = vrcp.pop %v998
      %v1001 = vmul.f32 1.0, %v1000
      %v1002 = vsel %vm999, %v1001, 0.0
      %v1003 = vadd.f32 %v996, %v1002
      %v1004 = vadd.f32 %v998, 1.0
      %v1005 = vsel %vm999, %v1004, %v998
      %v1006 = vrcp.pop %v1005
      %v1007 = vmul.f32 %v1006, %v1006
      %v1008 = vmul.f32 %v1007, -0.003968254
      %v1009 = vadd.f32 %v1008, 0.008333334
      %v1010 = vmul.f32 %v1007, %v1009
      %v1011 = vadd.f32 %v1010, -0.083333336
      %v1012 = vmul.f32 %v1007, %v1011
      %v1013 = vlog2.pop %v1005
      %v1014 = vmul.f32 %v1013, 0.6931472
      %v1015 = vmul.f32 %v1006, 0.5
      %v1016 = vsub.f32 %v1014, %v1015
      %v1017 = vadd.f32 %v1016, %v1012
      %v1018 = vsub.f32 %v1017, %v1003
      %vm1019 = vcmp.lt.f32.partialorder %v860, 8.0
      %vm1020 = vcmp.lt.f32.partialorder %v861, 8.0
      %vm1021 = vcmp.lt.f32.partialorder %v862, 8.0
      %v1022 = vsel %vm1019, %v860, 1.0
      %v1023 = vsel %vm1020, %v861, 1.0
      %v1024 = vsel %vm1021, %v862, 1.0
      %v1025 = vadd.f32 %v860, 1.0
      %v1026 = vadd.f32 %v861, 1.0
      %v1027 = vadd.f32 %v862, 1.0
      %v1028 = vsel %vm1019, %v1025, %v860
      %v1029 = vsel %vm1020, %v1026, %v861
      %v1030 = vsel %vm1021, %v1027, %v862
      %vm1031 = vcmp.lt.f32.partialorder %v1028, 8.0
      %vm1032 = vcmp.lt.f32.partialorder %v1029, 8.0
      %vm1033 = vcmp.lt.f32.partialorder %v1030, 8.0
      %v1034 = vsel %vm1031, %v1028, 1.0
      %v1035 = vsel %vm1032, %v1029, 1.0
      %v1036 = vsel %vm1033, %v1030, 1.0
      %v1037 = vmul.f32 %v1022, %v1034
      %v1038 = vmul.f32 %v1023, %v1035
      %v1039 = vmul.f32 %v1024, %v1036
      %v1040 = vadd.f32 %v1028, 1.0
      %v1041 = vadd.f32 %v1029, 1.0
      %v1042 = vadd.f32 %v1030, 1.0
      %v1043 = vsel %vm1031, %v1040, %v1028
      %v1044 = vsel %vm1032, %v1041, %v1029
      %v1045 = vsel %vm1033, %v1042, %v1030
      %vm1046 = vcmp.lt.f32.partialorder %v1043, 8.0
      %vm1047 = vcmp.lt.f32.partialorder %v1044, 8.0
      %vm1048 = vcmp.lt.f32.partialorder %v1045, 8.0
      %v1049 = vsel %vm1046, %v1043, 1.0
      %v1050 = vsel %vm1047, %v1044, 1.0
      %v1051 = vsel %vm1048, %v1045, 1.0
      %v1052 = vmul.f32 %v1037, %v1049
      %v1053 = vmul.f32 %v1038, %v1050
      %v1054 = vmul.f32 %v1039, %v1051
      %v1055 = vadd.f32 %v1043, 1.0
      %v1056 = vadd.f32 %v1044, 1.0
      %v1057 = vadd.f32 %v1045, 1.0
      %v1058 = vsel %vm1046, %v1055, %v1043
      %v1059 = vsel %vm1047, %v1056, %v1044
      %v1060 = vsel %vm1048, %v1057, %v1045
      %vm1061 = vcmp.lt.f32.partialorder %v1058, 8.0
      %vm1062 = vcmp.lt.f32.partialorder %v1059, 8.0
      %vm1063 = vcmp.lt.f32.partialorder %v1060, 8.0
      %v1064 = vsel %vm1061, %v1058, 1.0
      %v1065 = vsel %vm1062, %v1059, 1.0
      %v1066 = vsel %vm1063, %v1060, 1.0
      %v1067 = vmul.f32 %v1052, %v1064
      %v1068 = vmul.f32 %v1053, %v1065
      %v1069 = vmul.f32 %v1054, %v1066
      %v1070 = vadd.f32 %v1058, 1.0
      %v1071 = vadd.f32 %v1059, 1.0
      %v1072 = vadd.f32 %v1060, 1.0
      %v1073 = vsel %vm1061, %v1070, %v1058
      %v1074 = vsel %vm1062, %v1071, %v1059
      %v1075 = vsel %vm1063, %v1072, %v1060
      %vm1076 = vcmp.lt.f32.partialorder %v1073, 8.0
      %vm1077 = vcmp.lt.f32.partialorder %v1074, 8.0
      %vm1078 = vcmp.lt.f32.partialorder %v1075, 8.0
      %v1079 = vsel %vm1076, %v1073, 1.0
      %v1080 = vsel %vm1077, %v1074, 1.0
      %v1081 = vsel %vm1078, %v1075, 1.0
      %v1082 = vmul.f32 %v1067, %v1079
      %v1083 = vmul.f32 %v1068, %v1080
      %v1084 = vmul.f32 %v1069, %v1081
      %v1085 = vadd.f32 %v1073, 1.0
      %v1086 = vadd.f32 %v1074, 1.0
      %v1087 = vadd.f32 %v1075, 1.0
      %v1088 = vsel %vm1076, %v1085, %v1073
      %v1089 = vsel %vm1077, %v1086, %v1074
      %v1090 = vsel %vm1078, %v1087, %v1075
      %vm1091 = vcmp.lt.f32.partialorder %v1088, 8.0
      %vm1092 = vcmp.lt.f32.partialorder %v1089, 8.0
      %vm1093 = vcmp.lt.f32.partialorder %v1090, 8.0
      %v1094 = vsel %vm1091, %v1088, 1.0
      %v1095 = vsel %vm1092, %v1089, 1.0
      %v1096 = vsel %vm1093, %v1090, 1.0
      %v1097 = vmul.f32 %v1082, %v1094
      %v1098 = vmul.f32 %v1083, %v1095
      %v1099 = vmul.f32 %v1084, %v1096
      %v1100 = vadd.f32 %v1088, 1.0
      %v1101 = vadd.f32 %v1089, 1.0
      %v1102 = vadd.f32 %v1090, 1.0
      %v1103 = vsel %vm1091, %v1100, %v1088
      %v1104 = vsel %vm1092, %v1101, %v1089
      %v1105 = vsel %vm1093, %v1102, %v1090
      %vm1106 = vcmp.lt.f32.partialorder %v1103, 8.0
      %vm1107 = vcmp.lt.f32.partialorder %v1104, 8.0
      %vm1108 = vcmp.lt.f32.partialorder %v1105, 8.0
      %v1109 = vsel %vm1106, %v1103, 1.0
      %v1110 = vsel %vm1107, %v1104, 1.0
      %v1111 = vsel %vm1108, %v1105, 1.0
      %v1112 = vmul.f32 %v1097, %v1109
      %v1113 = vmul.f32 %v1098, %v1110
      %v1114 = vmul.f32 %v1099, %v1111
      %v1115 = vadd.f32 %v1103, 1.0
      %v1116 = vadd.f32 %v1104, 1.0
      %v1117 = vadd.f32 %v1105, 1.0
      %v1118 = vsel %vm1106, %v1115, %v1103
      %v1119 = vsel %vm1107, %v1116, %v1104
      %v1120 = vsel %vm1108, %v1117, %v1105
      %vm1121 = vcmp.lt.f32.partialorder %v1118, 8.0
      %vm1122 = vcmp.lt.f32.partialorder %v1119, 8.0
      %vm1123 = vcmp.lt.f32.partialorder %v1120, 8.0
      %v1124 = vsel %vm1121, %v1118, 1.0
      %v1125 = vsel %vm1122, %v1119, 1.0
      %v1126 = vsel %vm1123, %v1120, 1.0
      %v1127 = vmul.f32 %v1112, %v1124
      %v1128 = vmul.f32 %v1113, %v1125
      %v1129 = vmul.f32 %v1114, %v1126
      %v1130 = vadd.f32 %v1118, 1.0
      %v1131 = vadd.f32 %v1119, 1.0
      %v1132 = vadd.f32 %v1120, 1.0
      %v1133 = vsel %vm1121, %v1130, %v1118
      %v1134 = vsel %vm1122, %v1131, %v1119
      %v1135 = vsel %vm1123, %v1132, %v1120
      %v1136 = vrcp.pop %v1133
      %v1137 = vrcp.pop %v1134
      %v1138 = vrcp.pop %v1135
      %v1139 = vmul.f32 %v1136, %v1136
      %v1140 = vmul.f32 %v1137, %v1137
      %v1141 = vmul.f32 %v1138, %v1138
      %v1142 = vmul.f32 %v1139, -0.0005952381
      %v1143 = vmul.f32 %v1140, -0.0005952381
      %v1144 = vmul.f32 %v1141, -0.0005952381
      %v1145 = vadd.f32 %v1142, 0.0007936508
      %v1146 = vadd.f32 %v1143, 0.0007936508
      %v1147 = vadd.f32 %v1144, 0.0007936508
      %v1148 = vmul.f32 %v1139, %v1145
      %v1149 = vmul.f32 %v1140, %v1146
      %v1150 = vmul.f32 %v1141, %v1147
      %v1151 = vadd.f32 %v1148, -0.0027777778
      %v1152 = vadd.f32 %v1149, -0.0027777778
      %v1153 = vadd.f32 %v1150, -0.0027777778
      %v1154 = vmul.f32 %v1139, %v1151
      %v1155 = vmul.f32 %v1140, %v1152
      %v1156 = vmul.f32 %v1141, %v1153
      %v1157 = vadd.f32 %v1154, 0.083333336
      %v1158 = vadd.f32 %v1155, 0.083333336
      %v1159 = vadd.f32 %v1156, 0.083333336
      %v1160 = vmul.f32 %v1136, %v1157
      %v1161 = vmul.f32 %v1137, %v1158
      %v1162 = vmul.f32 %v1138, %v1159
      %v1163 = vsub.f32 %v1133, 0.5
      %v1164 = vsub.f32 %v1134, 0.5
      %v1165 = vsub.f32 %v1135, 0.5
      %v1166 = vlog2.pop %v1133
      %v1167 = vmul.f32 %v1166, 0.6931472
      %v1168 = vlog2.pop %v1134
      %v1169 = vmul.f32 %v1168, 0.6931472
      %v1170 = vlog2.pop %v1135
      %v1171 = vmul.f32 %v1170, 0.6931472
      %v1172 = vmul.f32 %v1163, %v1167
      %v1173 = vmul.f32 %v1164, %v1169
      %v1174 = vmul.f32 %v1165, %v1171
      %v1175 = vsub.f32 %v1172, %v1133
      %v1176 = vsub.f32 %v1173, %v1134
      %v1177 = vsub.f32 %v1174, %v1135
      %v1178 = vadd.f32 %v1175, 0.9189385
      %v1179 = vadd.f32 %v1176, 0.9189385
      %v1180 = vadd.f32 %v1177, 0.9189385
      %v1181 = vadd.f32 %v1178, %v1160
      %v1182 = vadd.f32 %v1179, %v1161
      %v1183 = vadd.f32 %v1180, %v1162
      %v1184 = vlog2.pop %v1127
      %v1185 = vmul.f32 %v1184, 0.6931472
      %v1186 = vlog2.pop %v1128
      %v1187 = vmul.f32 %v1186, 0.6931472
      %v1188 = vlog2.pop %v1129
      %v1189 = vmul.f32 %v1188, 0.6931472
      %v1190 = vsub.f32 %v1181, %v1185
      %v1191 = vsub.f32 %v1182, %v1187
      %v1192 = vsub.f32 %v1183, %v1189
      %v1196 = vcombine.high %v1190, %v1190
      %v1198 = vunpack.c.l.s4 1983009808
      %v1199 = vunpack.c.0.s8 %v1198
      %v1200 = vlaneseq
      %v1201 = vshrl.u32 %v1200, 7
      %v1202 = vsub.s32 %v1199, %v1201
      %v1203 = vrot.slane %v1190, %v1202
      %v1205 = vunpack.c.l.s4 1983009808
      %v1206 = vunpack.c.0.s8 %v1205
      %v1207 = vlaneseq
      %v1208 = vshrl.u32 %v1207, 7
      %v1209 = vsub.s32 %v1206, %v1208
      %v1210 = vrot.slane %v1196, %v1209
      %v1211 = vcombine.high %v1203, %v1203
      %v1212 = vcombine.high %v1210, %v1210
      %v1213 = vcombine.high %v1191, %v1191
      %v1215 = vunpack.c.l.s4 1983009808
      %v1216 = vunpack.c.0.s8 %v1215
      %v1217 = vlaneseq
      %v1218 = vshrl.u32 %v1217, 7
      %v1219 = vsub.s32 %v1216, %v1218
      %v1220 = vrot.slane %v1191, %v1219
      %v1222 = vunpack.c.l.s4 1983009808
      %v1223 = vunpack.c.0.s8 %v1222
      %v1224 = vlaneseq
      %v1225 = vshrl.u32 %v1224, 7
      %v1226 = vsub.s32 %v1223, %v1225
      %v1227 = vrot.slane %v1213, %v1226
      %v1228 = vcombine.high %v1220, %v1220
      %v1229 = vcombine.high %v1227, %v1227
      %v1230 = vcombine.high %v1192, %v1192
      %v1232 = vunpack.c.l.s4 1983009808
      %v1233 = vunpack.c.0.s8 %v1232
      %v1234 = vlaneseq
      %v1235 = vshrl.u32 %v1234, 7
      %v1236 = vsub.s32 %v1233, %v1235
      %v1237 = vrot.slane %v1192, %v1236
      %v1239 = vunpack.c.l.s4 1983009808
      %v1240 = vunpack.c.0.s8 %v1239
      %v1241 = vlaneseq
      %v1242 = vshrl.u32 %v1241, 7
      %v1243 = vsub.s32 %v1240, %v1242
      %v1244 = vrot.slane %v1230, %v1243
      %v1245 = vcombine.high %v1237, %v1237
      %v1257 = vsel %vm824, %v1203, 0.0
      %v1258 = vsel %vm824, %v1211, 0.0
      %v1259 = vadd.f32 %v1257, %v1258
      %v1260 = vsel %vm824, %v1210, 0.0
      %v1261 = vadd.f32 %v1259, %v1260
      %v1262 = vsel %vm824, %v1212, 0.0
      %v1263 = vadd.f32 %v1261, %v1262
      %v1264 = vsel %vm824, %v1220, 0.0
      %v1265 = vadd.f32 %v1263, %v1264
      %v1266 = vsel %vm824, %v1228, 0.0
      %v1267 = vadd.f32 %v1265, %v1266
      %v1268 = vsel %vm824, %v1227, 0.0
      %v1269 = vadd.f32 %v1267, %v1268
      %v1270 = vsel %vm824, %v1229, 0.0
      %v1271 = vadd.f32 %v1269, %v1270
      %v1272 = vsel %vm824, %v1237, 0.0
      %v1273 = vadd.f32 %v1271, %v1272
      %v1274 = vsel %vm824, %v1245, 0.0
      %v1275 = vadd.f32 %v1273, %v1274
      %v1276 = vsel %vm844, %v1244, 0.0
      %v1277 = vadd.f32 %v1275, %v1276
      %1278 = vadd.xlane.f32.xlu0 %v1277
      %v1279 = vpop.xlane.xlu0 %1278
      %v1280 = vsub.f32 %v860, 1.0
      %v1281 = vsub.f32 %v861, 1.0
      %v1282 = vsub.f32 %v862, 1.0
      %v1283 = vrcp.pop %v860
      %v1284 = vmul.f32 1.0, %v1283
      %v1285 = vrcp.pop %v861
      %v1286 = vmul.f32 1.0, %v1285
      %v1287 = vrcp.pop %v862
      %v1288 = vmul.f32 1.0, %v1287
      %v1289 = vsel %vm1019, %v1284, 0.0
      %v1290 = vsel %vm1020, %v1286, 0.0
      %v1291 = vsel %vm1021, %v1288, 0.0
      %v1292 = vadd.f32 %v1289, 0.0
      %v1293 = vadd.f32 %v1290, 0.0
      %v1294 = vadd.f32 %v1291, 0.0
      %v1295 = vrcp.pop %v1028
      %v1296 = vmul.f32 1.0, %v1295
      %v1297 = vrcp.pop %v1029
      %v1298 = vmul.f32 1.0, %v1297
      %v1299 = vrcp.pop %v1030
      %v1300 = vmul.f32 1.0, %v1299
      %v1301 = vsel %vm1031, %v1296, 0.0
      %v1302 = vsel %vm1032, %v1298, 0.0
      %v1303 = vsel %vm1033, %v1300, 0.0
      %v1304 = vadd.f32 %v1292, %v1301
      %v1305 = vadd.f32 %v1293, %v1302
      %v1306 = vadd.f32 %v1294, %v1303
      %v1307 = vrcp.pop %v1043
      %v1308 = vmul.f32 1.0, %v1307
      %v1309 = vrcp.pop %v1044
      %v1310 = vmul.f32 1.0, %v1309
      %v1311 = vrcp.pop %v1045
      %v1312 = vmul.f32 1.0, %v1311
      %v1313 = vsel %vm1046, %v1308, 0.0
      %v1314 = vsel %vm1047, %v1310, 0.0
      %v1315 = vsel %vm1048, %v1312, 0.0
      %v1316 = vadd.f32 %v1304, %v1313
      %v1317 = vadd.f32 %v1305, %v1314
      %v1318 = vadd.f32 %v1306, %v1315
      %v1319 = vrcp.pop %v1058
      %v1320 = vmul.f32 1.0, %v1319
      %v1321 = vrcp.pop %v1059
      %v1322 = vmul.f32 1.0, %v1321
      %v1323 = vrcp.pop %v1060
      %v1324 = vmul.f32 1.0, %v1323
      %v1325 = vsel %vm1061, %v1320, 0.0
      %v1326 = vsel %vm1062, %v1322, 0.0
      %v1327 = vsel %vm1063, %v1324, 0.0
      %v1328 = vadd.f32 %v1316, %v1325
      %v1329 = vadd.f32 %v1317, %v1326
      %v1330 = vadd.f32 %v1318, %v1327
      %v1331 = vrcp.pop %v1073
      %v1332 = vmul.f32 1.0, %v1331
      %v1333 = vrcp.pop %v1074
      %v1334 = vmul.f32 1.0, %v1333
      %v1335 = vrcp.pop %v1075
      %v1336 = vmul.f32 1.0, %v1335
      %v1337 = vsel %vm1076, %v1332, 0.0
      %v1338 = vsel %vm1077, %v1334, 0.0
      %v1339 = vsel %vm1078, %v1336, 0.0
      %v1340 = vadd.f32 %v1328, %v1337
      %v1341 = vadd.f32 %v1329, %v1338
      %v1342 = vadd.f32 %v1330, %v1339
      %v1343 = vrcp.pop %v1088
      %v1344 = vmul.f32 1.0, %v1343
      %v1345 = vrcp.pop %v1089
      %v1346 = vmul.f32 1.0, %v1345
      %v1347 = vrcp.pop %v1090
      %v1348 = vmul.f32 1.0, %v1347
      %v1349 = vsel %vm1091, %v1344, 0.0
      %v1350 = vsel %vm1092, %v1346, 0.0
      %v1351 = vsel %vm1093, %v1348, 0.0
      %v1352 = vadd.f32 %v1340, %v1349
      %v1353 = vadd.f32 %v1341, %v1350
      %v1354 = vadd.f32 %v1342, %v1351
      %v1355 = vrcp.pop %v1103
      %v1356 = vmul.f32 1.0, %v1355
      %v1357 = vrcp.pop %v1104
      %v1358 = vmul.f32 1.0, %v1357
      %v1359 = vrcp.pop %v1105
      %v1360 = vmul.f32 1.0, %v1359
      %v1361 = vsel %vm1106, %v1356, 0.0
      %v1362 = vsel %vm1107, %v1358, 0.0
      %v1363 = vsel %vm1108, %v1360, 0.0
      %v1364 = vadd.f32 %v1352, %v1361
      %v1365 = vadd.f32 %v1353, %v1362
      %v1366 = vadd.f32 %v1354, %v1363
      %v1367 = vrcp.pop %v1118
      %v1368 = vmul.f32 1.0, %v1367
      %v1369 = vrcp.pop %v1119
      %v1370 = vmul.f32 1.0, %v1369
      %v1371 = vrcp.pop %v1120
      %v1372 = vmul.f32 1.0, %v1371
      %v1373 = vsel %vm1121, %v1368, 0.0
      %v1374 = vsel %vm1122, %v1370, 0.0
      %v1375 = vsel %vm1123, %v1372, 0.0
      %v1376 = vadd.f32 %v1364, %v1373
      %v1377 = vadd.f32 %v1365, %v1374
      %v1378 = vadd.f32 %v1366, %v1375
      %v1379 = vmul.f32 %v1139, -0.003968254
      %v1380 = vmul.f32 %v1140, -0.003968254
      %v1381 = vmul.f32 %v1141, -0.003968254
      %v1382 = vadd.f32 %v1379, 0.008333334
      %v1383 = vadd.f32 %v1380, 0.008333334
      %v1384 = vadd.f32 %v1381, 0.008333334
      %v1385 = vmul.f32 %v1139, %v1382
      %v1386 = vmul.f32 %v1140, %v1383
      %v1387 = vmul.f32 %v1141, %v1384
      %v1388 = vadd.f32 %v1385, -0.083333336
      %v1389 = vadd.f32 %v1386, -0.083333336
      %v1390 = vadd.f32 %v1387, -0.083333336
      %v1391 = vmul.f32 %v1139, %v1388
      %v1392 = vmul.f32 %v1140, %v1389
      %v1393 = vmul.f32 %v1141, %v1390
      %v1394 = vmul.f32 %v1136, 0.5
      %v1395 = vmul.f32 %v1137, 0.5
      %v1396 = vmul.f32 %v1138, 0.5
      %v1397 = vsub.f32 %v1167, %v1394
      %v1398 = vsub.f32 %v1169, %v1395
      %v1399 = vsub.f32 %v1171, %v1396
      %v1400 = vadd.f32 %v1397, %v1391
      %v1401 = vadd.f32 %v1398, %v1392
      %v1402 = vadd.f32 %v1399, %v1393
      %v1403 = vsub.f32 %v1400, %v1376
      %v1404 = vsub.f32 %v1401, %v1377
      %v1405 = vsub.f32 %v1402, %v1378
      %v1408 = vunpack.c.l.s4 269488144
      %v1409 = vunpack.c.0.s8 %v1408
      %v1410 = vlaneseq
      %v1411 = vshrl.u32 %v1410, 7
      %v1412 = vsub.s32 %v1409, %v1411
      %v1413 = vrot.slane %v1018, %v1412
      %v1415 = vsub.f32 %v1403, %v1413
      %v1416 = vsub.f32 %v1404, %v1413
      %v1417 = vsub.f32 %v1405, %v1413
      %v1418 = vmul.f32 %v1280, %v1415
      %v1419 = vmul.f32 %v1281, %v1416
      %v1420 = vmul.f32 %v1282, %v1417
      %v1424 = vcombine.high %v1418, %v1418
      %v1426 = vunpack.c.l.s4 1983009808
      %v1427 = vunpack.c.0.s8 %v1426
      %v1428 = vlaneseq
      %v1429 = vshrl.u32 %v1428, 7
      %v1430 = vsub.s32 %v1427, %v1429
      %v1431 = vrot.slane %v1418, %v1430
      %v1433 = vunpack.c.l.s4 1983009808
      %v1434 = vunpack.c.0.s8 %v1433
      %v1435 = vlaneseq
      %v1436 = vshrl.u32 %v1435, 7
      %v1437 = vsub.s32 %v1434, %v1436
      %v1438 = vrot.slane %v1424, %v1437
      %v1439 = vcombine.high %v1431, %v1431
      %v1440 = vcombine.high %v1438, %v1438
      %v1441 = vcombine.high %v1419, %v1419
      %v1443 = vunpack.c.l.s4 1983009808
      %v1444 = vunpack.c.0.s8 %v1443
      %v1445 = vlaneseq
      %v1446 = vshrl.u32 %v1445, 7
      %v1447 = vsub.s32 %v1444, %v1446
      %v1448 = vrot.slane %v1419, %v1447
      %v1450 = vunpack.c.l.s4 1983009808
      %v1451 = vunpack.c.0.s8 %v1450
      %v1452 = vlaneseq
      %v1453 = vshrl.u32 %v1452, 7
      %v1454 = vsub.s32 %v1451, %v1453
      %v1455 = vrot.slane %v1441, %v1454
      %v1456 = vcombine.high %v1448, %v1448
      %v1457 = vcombine.high %v1455, %v1455
      %v1458 = vcombine.high %v1420, %v1420
      %v1460 = vunpack.c.l.s4 1983009808
      %v1461 = vunpack.c.0.s8 %v1460
      %v1462 = vlaneseq
      %v1463 = vshrl.u32 %v1462, 7
      %v1464 = vsub.s32 %v1461, %v1463
      %v1465 = vrot.slane %v1420, %v1464
      %v1467 = vunpack.c.l.s4 1983009808
      %v1468 = vunpack.c.0.s8 %v1467
      %v1469 = vlaneseq
      %v1470 = vshrl.u32 %v1469, 7
      %v1471 = vsub.s32 %v1468, %v1470
      %v1472 = vrot.slane %v1458, %v1471
      %v1473 = vcombine.high %v1465, %v1465
      %v1485 = vsel %vm824, %v1431, 0.0
      %v1486 = vsel %vm824, %v1439, 0.0
      %v1487 = vadd.f32 %v1485, %v1486
      %v1488 = vsel %vm824, %v1438, 0.0
      %v1489 = vadd.f32 %v1487, %v1488
      %v1490 = vsel %vm824, %v1440, 0.0
      %v1491 = vadd.f32 %v1489, %v1490
      %v1492 = vsel %vm824, %v1448, 0.0
      %v1493 = vadd.f32 %v1491, %v1492
      %v1494 = vsel %vm824, %v1456, 0.0
      %v1495 = vadd.f32 %v1493, %v1494
      %v1496 = vsel %vm824, %v1455, 0.0
      %v1497 = vadd.f32 %v1495, %v1496
      %v1498 = vsel %vm824, %v1457, 0.0
      %v1499 = vadd.f32 %v1497, %v1498
      %v1500 = vsel %vm824, %v1465, 0.0
      %v1501 = vadd.f32 %v1499, %v1500
      %v1502 = vsel %vm824, %v1473, 0.0
      %v1503 = vadd.f32 %v1501, %v1502
      %v1504 = vsel %vm844, %v1472, 0.0
      %v1505 = vadd.f32 %v1503, %v1504
      %1506 = vadd.xlane.f32.xlu0 %v1505
      %v1507 = vpop.xlane.xlu0 %1506
      %v1508 = vsel %vm950, %v949, 1.0
      %v1509 = vsel %vm957, %v956, 1.0
      %v1510 = vmul.f32 %v1508, %v1509
      %v1511 = vsel %vm964, %v963, 1.0
      %v1512 = vmul.f32 %v1510, %v1511
      %v1513 = vsel %vm971, %v970, 1.0
      %v1514 = vmul.f32 %v1512, %v1513
      %v1515 = vsel %vm978, %v977, 1.0
      %v1516 = vmul.f32 %v1514, %v1515
      %v1517 = vsel %vm985, %v984, 1.0
      %v1518 = vmul.f32 %v1516, %v1517
      %v1519 = vsel %vm992, %v991, 1.0
      %v1520 = vmul.f32 %v1518, %v1519
      %v1521 = vsel %vm999, %v998, 1.0
      %v1522 = vmul.f32 %v1520, %v1521
      %v1523 = vmul.f32 %v1007, -0.0005952381
      %v1524 = vadd.f32 %v1523, 0.0007936508
      %v1525 = vmul.f32 %v1007, %v1524
      %v1526 = vadd.f32 %v1525, -0.0027777778
      %v1527 = vmul.f32 %v1007, %v1526
      %v1528 = vadd.f32 %v1527, 0.083333336
      %v1529 = vmul.f32 %v1006, %v1528
      %v1530 = vsub.f32 %v1005, 0.5
      %v1531 = vmul.f32 %v1530, %v1014
      %v1532 = vsub.f32 %v1531, %v1005
      %v1533 = vadd.f32 %v1532, 0.9189385
      %v1534 = vadd.f32 %v1533, %v1529
      %v1535 = vlog2.pop %v1522
      %v1536 = vmul.f32 %v1535, 0.6931472
      %v1537 = vsub.f32 %v1534, %v1536
      %v1538 = vsub.f32 %v1537, 8183.5957
      %v1539 = vsub.f32 %v1538, %v1279
      %v1540 = vadd.f32 %v1539, %v1507
      %1541 = vst.msk [vmem:[%s6] sm:$0x3] %vm850, %v1540
    $region33: #{forward.1} parent=1 // pred_fallthru
      _
    // Predicated region
    $region34: #{forward.1} parent=1 // pred_check
      _
    $region35: #{forward.1} parent=1 // pred_check_branch
      %1543 = sbr.rel (0) target = $region37
    $region36: #{forward.1} parent=1 // pred_region
      _
    $region37: #{forward.1} parent=1 // pred_fallthru
      _
    // Predicated region
    $region38: #{forward.1} parent=1 // pred_check
      _
    $region39: #{forward.1} parent=1 // pred_check_branch
      %1545 = sbr.rel (0) target = $region41
    $region40: #{forward.1} parent=1 // pred_region
      _
    $region41: #{forward.1} parent=1 // pred_fallthru
      _
    // Predicated region
    $region42: #{forward.1} parent=1 // pred_check
      _
    $region43: #{forward.1} parent=1 // pred_check_branch
      %1547 = sbr.rel (0) target = $region45
    $region44: #{forward.1} parent=1 // pred_region
      _
    $region45: #{forward.1} parent=1 // pred_fallthru
      _
    // Predicated region
    $region46: #{forward.1} parent=1 // pred_check
      _
    $region47: #{forward.1} parent=1 // pred_check_branch
      %1549 = sbr.rel (0) target = $region49
    $region48: #{forward.1} parent=1 // pred_region
      _
    $region49: #{forward.1} parent=1 // pred_fallthru
      _
    %1550 = vsyncpa [#allocation3], 1

</llo_original>
